<compile_context>
chip_gen: v7x
topology: tpu7x:2x2x1
jax: 0.10.0
libtpu: 0.0.40
codegen_flags: <defaults>
</compile_context>

<pallas_src>
import functools

import jax
import jax.numpy as jnp
from jax.experimental import pallas as pl
from jax.experimental.pallas import tpu as pltpu


def _round_up(x, m):
    return ((x + m - 1) // m) * m


def _num_tensorcores():
    """TensorCores per device (1 on v5e/v6e, 2 on megacore parts such as v7x)."""
    try:
        return max(1, min(2, int(getattr(jax.devices()[0], "num_cores", 1))))
    except Exception:  # pragma: no cover - defensive
        return 1


def _pick_bt(n, batch_tile, num_tc):
    """Batch-tile size: one tile per TensorCore when it fits, else `batch_tile`."""
    n256 = _round_up(max(n, 1), 256)
    if num_tc > 1:
        # Balanced grid across TensorCores (dimension_semantics=("parallel",)).
        per_core = _round_up(pl.cdiv(n256, num_tc), 256)
        return min(batch_tile, per_core)
    # Single TC: a single grid step when it fits removes the per-step overhead.
    return min(batch_tile, n256)


def _pick_chunks(bt):
    """Split the lane axis into a few independent sub-chunks for MXU/EUP overlap."""
    for nc in (4, 2):
        if bt % nc == 0 and (bt // nc) % 128 == 0 and bt // nc >= 256:
            return nc, bt // nc
    return 1, bt


def _pinn_mlp_kernel(x_ref, small_ref, wsq_ref, out_ref, *,
                     in_dim, n_hidden_sq, n_chunks, chunk):
    """Whole MLP in transposed layout: batch on lanes, features on sublanes."""
    c_b0 = in_dim                       # column of first-layer bias
    c_bh = in_dim + 1                   # first column of hidden-layer biases
    c_wl = in_dim + 1 + n_hidden_sq     # column of last-layer weight
    c_bl = c_wl + 1                     # column of last-layer bias (broadcast)

    # Parameter reads hoisted out of the chunk loop (reused by every chunk).
    w0 = [small_ref[:, f:f + 1] for f in range(in_dim)]                # in_dim x (H, 1)
    b0 = small_ref[:, c_b0:c_b0 + 1]                                   # (H, 1)
    wh = [wsq_ref[j] for j in range(n_hidden_sq)]                      # (H, H) each
    bh = [small_ref[:, c_bh + j:c_bh + j + 1] for j in range(n_hidden_sq)]
    w_last = small_ref[:, c_wl:c_wl + 1]                               # (H, 1)
    b_last = small_ref[0:1, c_bl:c_bl + 1]                             # (1, 1)

    # Independent lane sub-chunks, unrolled: the scheduler overlaps chunk c+1's MXU
    # matmuls with chunk c's EUP tanh chain (single EUP slot is the saturating unit).
    for c in range(n_chunks):
        lo = c * chunk
        xt = x_ref[:, lo:lo + chunk]                                   # (in_dim, chunk)

        # Layer 0: tiny K (= in_dim) -> broadcast FMAs on the VPU, not the MXU.
        z = b0
        for f in range(in_dim):
            z = z + w0[f] * xt[f:f + 1, :]                             # (H, chunk)
        a = jnp.tanh(z)

        # Square hidden layers: MXU matmuls with N = chunk (lane-packed RHS).
        for j in range(n_hidden_sq):
            z = jnp.dot(wh[j], a, preferred_element_type=jnp.float32) + bh[j]
            a = jnp.tanh(z)

        # Last layer (out_dim == 1): weighted sublane reduce, lane-dense (1, chunk) store.
        out_ref[:, lo:lo + chunk] = (
            jnp.sum(a * w_last, axis=0, keepdims=True) + b_last)


def pack_params(weights, biases):
    """Pack parameters into two arrays (done once, outside the training loop).

    weights[i]: (layers_dim[i], layers_dim[i+1]) f32 (math is a @ W + b)
    biases[i]:  (1, layers_dim[i+1])             f32
    Returns:
      small: (H, in_dim + 1 + L_h + 2) — [W0^T | b0 | b_1..b_Lh | w_last | b_last(bcast)]
      wsq:   (L_h, H, H)               — square hidden weights in (out, in) layout
    """
    num_layers = len(weights)
    assert num_layers >= 3, "need at least one square hidden layer (layers_dim >= 4 long)"
    in_dim, hidden = weights[0].shape
    out_dim = weights[-1].shape[1]
    n_hidden_sq = num_layers - 2
    assert out_dim == 1, "kernel specialized for the PINN scalar output u(x,t)"
    assert in_dim <= 8, "kernel specialized for small PINN input dims (x, t)"
    for w in weights[1:-1]:
        assert w.shape == (hidden, hidden), "uniform hidden width required"
    assert weights[-1].shape == (hidden, out_dim)

    f32 = jnp.float32
    cols = [weights[0].T.astype(f32),          # (H, in_dim): first-layer weight, (out,in)
            biases[0].T.astype(f32)]           # (H, 1): first-layer bias
    for j in range(n_hidden_sq):
        cols.append(biases[1 + j].T.astype(f32))           # (H, 1): hidden biases
    cols.append(weights[-1].astype(f32))                    # (H, 1): last-layer weight
    cols.append(jnp.full((hidden, 1), biases[-1][0, 0], dtype=f32))  # last bias (bcast)
    small = jnp.concatenate(cols, axis=1)                   # (H, in_dim + L_h + 3)
    wsq = jnp.stack([weights[1 + j].T.astype(f32) for j in range(n_hidden_sq)], axis=0)
    return small, wsq


def prepare_input(x, *, batch_tile=8192, num_tensorcores=None):
    """Layout plumbing, hoisted out of the hot path: (N, in_dim) -> padded (in_dim, n_pad).

    Collocation points are fixed across PINN training iterations, so call this once and
    reuse `x_t` for every forward; returns (x_t, batch_tile_used).
    """
    if num_tensorcores is None:
        num_tensorcores = _num_tensorcores()
    assert batch_tile % 256 == 0, "batch_tile must be a multiple of 256"
    x = x.astype(jnp.float32)                 # matches PyTorch Convert(): .float()
    n, _ = x.shape
    bt = _pick_bt(n, batch_tile, num_tensorcores)
    n_pad = pl.cdiv(n, bt) * bt
    x_t = jnp.pad(x.T, ((0, 0), (0, n_pad - n)))
    return x_t, bt


def pinn_forward_t(x_t, small, wsq, *, batch_tile):
    """Hot path: transposed, padded input -> transposed output, one Pallas kernel.

    x_t:   (in_dim, n_pad) f32, n_pad a multiple of batch_tile
    small: (H, in_dim + L_h + 3) packed small params (see pack_params)
    wsq:   (L_h, H, H) packed square hidden weights
    returns (1, n_pad) f32
    """
    in_dim, n_pad = x_t.shape
    n_hidden_sq = wsq.shape[0]
    out_dim = 1
    bt = batch_tile
    assert bt % 256 == 0 and n_pad % bt == 0
    grid = (n_pad // bt,)
    n_chunks, chunk = _pick_chunks(bt)

    kernel = functools.partial(_pinn_mlp_kernel, in_dim=in_dim,
                               n_hidden_sq=n_hidden_sq,
                               n_chunks=n_chunks, chunk=chunk)

    return pl.pallas_call(
        kernel,
        out_shape=jax.ShapeDtypeStruct((out_dim, n_pad), jnp.float32),
        grid_spec=pltpu.PrefetchScalarGridSpec(
            num_scalar_prefetch=0,
            grid=grid,
            in_specs=[
                # Batch tile: batch on the lane axis, features on sublanes.
                pl.BlockSpec((in_dim, bt), lambda i: (0, i)),
                # Constant index_maps -> params stay VMEM-resident across grid steps.
                pl.BlockSpec(small.shape, lambda i: (0, 0)),
                pl.BlockSpec(wsq.shape, lambda i: (0, 0, 0)),
            ],
            out_specs=pl.BlockSpec((out_dim, bt), lambda i: (0, i)),
        ),
        # Batch tiles are independent -> shard the grid across TensorCores (v7x).
        compiler_params=pltpu.CompilerParams(
            dimension_semantics=("parallel",)),
    )(x_t, small, wsq)


def pinn_forward(x, weights, biases, *, batch_tile=8192, num_tensorcores=None):
    """Drop-in forward matching the PyTorch module: (N, in_dim) -> (N, 1).

    For training loops, hoist `pack_params` / `prepare_input` and call `pinn_forward_t`
    directly so the pad/transpose/slice XLA ops run once, not every step.
    """
    n = x.shape[0]
    small, wsq = pack_params(weights, biases)
    x_t, bt = prepare_input(x, batch_tile=batch_tile, num_tensorcores=num_tensorcores)
    out_t = pinn_forward_t(x_t, small, wsq, batch_tile=bt)
    return out_t[:, :n].T


def init_pinn_params(layers_dim, key):
    """Xavier-normal (gain=1.0) weights, zero biases — matches the PyTorch init."""
    weights, biases = [], []
    for i in range(len(layers_dim) - 1):
        fan_in, fan_out = layers_dim[i], layers_dim[i + 1]
        key, sub = jax.random.split(key)
        std = (2.0 / (fan_in + fan_out)) ** 0.5
        # stored as (in_dim, out_dim) so math is x @ W + b
        w = std * jax.random.normal(sub, (fan_in, fan_out), dtype=jnp.float32)
        b = jnp.zeros((1, fan_out), dtype=jnp.float32)
        weights.append(w)
        biases.append(b)
    return weights, biases


def pinn_forward_ref(x, weights, biases):
    """Pure-JAX reference of the PyTorch forward()."""
    a = x.astype(jnp.float32)
    for i in range(len(weights) - 1):
        a = jnp.tanh(a @ weights[i] + biases[i])
    return a @ weights[-1] + biases[-1]


if __name__ == "__main__":
    # Burgers PINN: 2 inputs (x, t), a few hidden tanh layers, 1 output u(x, t).
    layers_dim = [2, 32, 32, 32, 1]
    batch = 1000                      # non-tile-multiple -> exercises the pad/slice path

    key = jax.random.PRNGKey(0)
    key, xkey = jax.random.split(key)
    x = jax.random.uniform(xkey, (batch, layers_dim[0]), dtype=jnp.float32,
                           minval=-1.0, maxval=1.0)
    weights, biases = init_pinn_params(layers_dim, key)
    ref = pinn_forward_ref(x, weights, biases)

    # Drop-in path (matches the PyTorch module's forward signature).
    out = jax.block_until_ready(pinn_forward(x, weights, biases))
    assert out.shape == (batch, layers_dim[-1])
    assert jnp.allclose(out, ref, atol=1e-5, rtol=1e-5), "mismatch vs. reference"

    # Hoisted hot path (training loop): layout + packing done once, kernel reused.
    small, wsq = pack_params(weights, biases)
    x_t, bt = prepare_input(x)
    out_t = jax.block_until_ready(pinn_forward_t(x_t, small, wsq, batch_tile=bt))
    assert jnp.allclose(out_t[:, :batch].T, ref, atol=1e-5, rtol=1e-5), "hot-path mismatch"

    # TODO(synk): loss_bc / loss_ic / loss_pde need u_x/u_t/u_xx + MSE; the biggest
    # end-to-end win is fusing forward-mode tangents (reusing 1 - tanh^2) into this
    # kernel instead of letting jax.grad/jvp re-walk the MLP as separate launches.
    print("KERNEL_OK")
</pallas_src>

<mosaic_0001>
module attributes {stable_mosaic.version = 11 : i64} {
  func.func @_pinn_mlp_kernel(%arg0: i32, %arg1: memref<2x1024xf32, #tpu.memory_space<vmem>>, %arg2: memref<32x7xf32, #tpu.memory_space<vmem>>, %arg3: memref<2x32x32xf32, #tpu.memory_space<vmem>>, %arg4: memref<1x1024xf32, #tpu.memory_space<vmem>>) attributes {dimension_semantics = [#tpu.dimension_semantics<parallel>], iteration_bounds = array<i64: 1>, scalar_prefetch = 0 : i64, scratch_operands = 0 : i64, tpu.core_type = #tpu.core_type<tc>, window_params = [{transform_indices = @transform_0, window_bounds = array<i64: 2, 1024>}, {pipeline_mode = #tpu.pipeline_mode<synchronous>, transform_indices = @transform_1, window_bounds = array<i64: 32, 7>}, {pipeline_mode = #tpu.pipeline_mode<synchronous>, transform_indices = @transform_2, window_bounds = array<i64: 2, 32, 32>}, {transform_indices = @transform_3, window_bounds = array<i64: 1, 1024>}]} {
    %c0 = arith.constant 0 : index
    %c0_0 = arith.constant 0 : index
    %0 = vector.load %arg2[%c0, %c0_0] : memref<32x7xf32, #tpu.memory_space<vmem>>, vector<32x1xf32>
    %c0_1 = arith.constant 0 : index
    %c1 = arith.constant 1 : index
    %1 = vector.load %arg2[%c0_1, %c1] : memref<32x7xf32, #tpu.memory_space<vmem>>, vector<32x1xf32>
    %c0_2 = arith.constant 0 : index
    %c2 = arith.constant 2 : index
    %2 = vector.load %arg2[%c0_2, %c2] : memref<32x7xf32, #tpu.memory_space<vmem>>, vector<32x1xf32>
    %c0_3 = arith.constant 0 : index
    %c0_4 = arith.constant 0 : index
    %c0_5 = arith.constant 0 : index
    %3 = vector.load %arg3[%c0_3, %c0_4, %c0_5] : memref<2x32x32xf32, #tpu.memory_space<vmem>>, vector<1x32x32xf32>
    %4 = vector.shape_cast %3 : vector<1x32x32xf32> to vector<32x32xf32>
    %c1_6 = arith.constant 1 : index
    %c0_7 = arith.constant 0 : index
    %c0_8 = arith.constant 0 : index
    %5 = vector.load %arg3[%c1_6, %c0_7, %c0_8] : memref<2x32x32xf32, #tpu.memory_space<vmem>>, vector<1x32x32xf32>
    %6 = vector.shape_cast %5 : vector<1x32x32xf32> to vector<32x32xf32>
    %c0_9 = arith.constant 0 : index
    %c3 = arith.constant 3 : index
    %7 = vector.load %arg2[%c0_9, %c3] : memref<32x7xf32, #tpu.memory_space<vmem>>, vector<32x1xf32>
    %c0_10 = arith.constant 0 : index
    %c4 = arith.constant 4 : index
    %8 = vector.load %arg2[%c0_10, %c4] : memref<32x7xf32, #tpu.memory_space<vmem>>, vector<32x1xf32>
    %c0_11 = arith.constant 0 : index
    %c5 = arith.constant 5 : index
    %9 = vector.load %arg2[%c0_11, %c5] : memref<32x7xf32, #tpu.memory_space<vmem>>, vector<32x1xf32>
    %c0_12 = arith.constant 0 : index
    %c6 = arith.constant 6 : index
    %10 = vector.load %arg2[%c0_12, %c6] : memref<32x7xf32, #tpu.memory_space<vmem>>, vector<1x1xf32>
    %c0_13 = arith.constant 0 : index
    %c0_14 = arith.constant 0 : index
    %11 = vector.load %arg1[%c0_13, %c0_14] : memref<2x1024xf32, #tpu.memory_space<vmem>>, vector<2x256xf32>
    %12 = vector.extract_strided_slice %11 {offsets = [0, 0], sizes = [1, 256], strides = [1, 1]} : vector<2x256xf32> to vector<1x256xf32>
    %13 = vector.broadcast %0 : vector<32x1xf32> to vector<32x256xf32>
    %14 = vector.broadcast %12 : vector<1x256xf32> to vector<32x256xf32>
    %15 = arith.mulf %13, %14 : vector<32x256xf32>
    %16 = vector.broadcast %2 : vector<32x1xf32> to vector<32x256xf32>
    %17 = arith.addf %16, %15 : vector<32x256xf32>
    %18 = vector.extract_strided_slice %11 {offsets = [1, 0], sizes = [1, 256], strides = [1, 1]} : vector<2x256xf32> to vector<1x256xf32>
    %19 = vector.broadcast %1 : vector<32x1xf32> to vector<32x256xf32>
    %20 = vector.broadcast %18 : vector<1x256xf32> to vector<32x256xf32>
    %21 = arith.mulf %19, %20 : vector<32x256xf32>
    %22 = arith.addf %17, %21 : vector<32x256xf32>
    %23 = math.tanh %22 : vector<32x256xf32>
    %cst = arith.constant dense<0.000000e+00> : vector<32x256xf32>
    %24 = tpu.matmul %4, %23, %cst {dimension_numbers = #tpu.dot_dimension_numbers<[1], [0], [0], [1], [0, 0, 1, 1], [], []>} : vector<32x32xf32>, vector<32x256xf32>, vector<32x256xf32> -> vector<32x256xf32>
    %25 = vector.broadcast %7 : vector<32x1xf32> to vector<32x256xf32>
    %26 = arith.addf %24, %25 : vector<32x256xf32>
    %27 = math.tanh %26 : vector<32x256xf32>
    %cst_15 = arith.constant dense<0.000000e+00> : vector<32x256xf32>
    %28 = tpu.matmul %6, %27, %cst_15 {dimension_numbers = #tpu.dot_dimension_numbers<[1], [0], [0], [1], [0, 0, 1, 1], [], []>} : vector<32x32xf32>, vector<32x256xf32>, vector<32x256xf32> -> vector<32x256xf32>
    %29 = vector.broadcast %8 : vector<32x1xf32> to vector<32x256xf32>
    %30 = arith.addf %28, %29 : vector<32x256xf32>
    %31 = math.tanh %30 : vector<32x256xf32>
    %32 = vector.broadcast %9 : vector<32x1xf32> to vector<32x256xf32>
    %33 = arith.mulf %31, %32 : vector<32x256xf32>
    %cst_16 = arith.constant dense<0.000000e+00> : vector<256xf32>
    %34 = vector.multi_reduction <add>, %33, %cst_16 [0] : vector<32x256xf32> to vector<256xf32>
    %35 = vector.shape_cast %34 : vector<256xf32> to vector<1x256xf32>
    %36 = vector.broadcast %10 : vector<1x1xf32> to vector<1x256xf32>
    %37 = arith.addf %35, %36 : vector<1x256xf32>
    %c0_17 = arith.constant 0 : index
    %c0_18 = arith.constant 0 : index
    %38 = vector.load %arg4[%c0_17, %c0_18] : memref<1x1024xf32, #tpu.memory_space<vmem>>, vector<1x256xf32>
    tpu.vector_store %arg4[%c0_17, %c0_18], %37 {strides = array<i32>} : memref<1x1024xf32, #tpu.memory_space<vmem>>, vector<1x256xf32>,
    %c0_19 = arith.constant 0 : index
    %c256 = arith.constant 256 : index
    %39 = vector.load %arg1[%c0_19, %c256] : memref<2x1024xf32, #tpu.memory_space<vmem>>, vector<2x256xf32>
    %40 = vector.extract_strided_slice %39 {offsets = [0, 0], sizes = [1, 256], strides = [1, 1]} : vector<2x256xf32> to vector<1x256xf32>
    %41 = vector.broadcast %0 : vector<32x1xf32> to vector<32x256xf32>
    %42 = vector.broadcast %40 : vector<1x256xf32> to vector<32x256xf32>
    %43 = arith.mulf %41, %42 : vector<32x256xf32>
    %44 = vector.broadcast %2 : vector<32x1xf32> to vector<32x256xf32>
    %45 = arith.addf %44, %43 : vector<32x256xf32>
    %46 = vector.extract_strided_slice %39 {offsets = [1, 0], sizes = [1, 256], strides = [1, 1]} : vector<2x256xf32> to vector<1x256xf32>
    %47 = vector.broadcast %1 : vector<32x1xf32> to vector<32x256xf32>
    %48 = vector.broadcast %46 : vector<1x256xf32> to vector<32x256xf32>
    %49 = arith.mulf %47, %48 : vector<32x256xf32>
    %50 = arith.addf %45, %49 : vector<32x256xf32>
    %51 = math.tanh %50 : vector<32x256xf32>
    %cst_20 = arith.constant dense<0.000000e+00> : vector<32x256xf32>
    %52 = tpu.matmul %4, %51, %cst_20 {dimension_numbers = #tpu.dot_dimension_numbers<[1], [0], [0], [1], [0, 0, 1, 1], [], []>} : vector<32x32xf32>, vector<32x256xf32>, vector<32x256xf32> -> vector<32x256xf32>
    %53 = vector.broadcast %7 : vector<32x1xf32> to vector<32x256xf32>
    %54 = arith.addf %52, %53 : vector<32x256xf32>
    %55 = math.tanh %54 : vector<32x256xf32>
    %cst_21 = arith.constant dense<0.000000e+00> : vector<32x256xf32>
    %56 = tpu.matmul %6, %55, %cst_21 {dimension_numbers = #tpu.dot_dimension_numbers<[1], [0], [0], [1], [0, 0, 1, 1], [], []>} : vector<32x32xf32>, vector<32x256xf32>, vector<32x256xf32> -> vector<32x256xf32>
    %57 = vector.broadcast %8 : vector<32x1xf32> to vector<32x256xf32>
    %58 = arith.addf %56, %57 : vector<32x256xf32>
    %59 = math.tanh %58 : vector<32x256xf32>
    %60 = vector.broadcast %9 : vector<32x1xf32> to vector<32x256xf32>
    %61 = arith.mulf %59, %60 : vector<32x256xf32>
    %cst_22 = arith.constant dense<0.000000e+00> : vector<256xf32>
    %62 = vector.multi_reduction <add>, %61, %cst_22 [0] : vector<32x256xf32> to vector<256xf32>
    %63 = vector.shape_cast %62 : vector<256xf32> to vector<1x256xf32>
    %64 = vector.broadcast %10 : vector<1x1xf32> to vector<1x256xf32>
    %65 = arith.addf %63, %64 : vector<1x256xf32>
    %c0_23 = arith.constant 0 : index
    %c256_24 = arith.constant 256 : index
    %66 = vector.load %arg4[%c0_23, %c256_24] : memref<1x1024xf32, #tpu.memory_space<vmem>>, vector<1x256xf32>
    tpu.vector_store %arg4[%c0_23, %c256_24], %65 {strides = array<i32>} : memref<1x1024xf32, #tpu.memory_space<vmem>>, vector<1x256xf32>,
    %c0_25 = arith.constant 0 : index
    %c512 = arith.constant 512 : index
    %67 = vector.load %arg1[%c0_25, %c512] : memref<2x1024xf32, #tpu.memory_space<vmem>>, vector<2x256xf32>
    %68 = vector.extract_strided_slice %67 {offsets = [0, 0], sizes = [1, 256], strides = [1, 1]} : vector<2x256xf32> to vector<1x256xf32>
    %69 = vector.broadcast %0 : vector<32x1xf32> to vector<32x256xf32>
    %70 = vector.broadcast %68 : vector<1x256xf32> to vector<32x256xf32>
    %71 = arith.mulf %69, %70 : vector<32x256xf32>
    %72 = vector.broadcast %2 : vector<32x1xf32> to vector<32x256xf32>
    %73 = arith.addf %72, %71 : vector<32x256xf32>
    %74 = vector.extract_strided_slice %67 {offsets = [1, 0], sizes = [1, 256], strides = [1, 1]} : vector<2x256xf32> to vector<1x256xf32>
    %75 = vector.broadcast %1 : vector<32x1xf32> to vector<32x256xf32>
    %76 = vector.broadcast %74 : vector<1x256xf32> to vector<32x256xf32>
    %77 = arith.mulf %75, %76 : vector<32x256xf32>
    %78 = arith.addf %73, %77 : vector<32x256xf32>
    %79 = math.tanh %78 : vector<32x256xf32>
    %cst_26 = arith.constant dense<0.000000e+00> : vector<32x256xf32>
    %80 = tpu.matmul %4, %79, %cst_26 {dimension_numbers = #tpu.dot_dimension_numbers<[1], [0], [0], [1], [0, 0, 1, 1], [], []>} : vector<32x32xf32>, vector<32x256xf32>, vector<32x256xf32> -> vector<32x256xf32>
    %81 = vector.broadcast %7 : vector<32x1xf32> to vector<32x256xf32>
    %82 = arith.addf %80, %81 : vector<32x256xf32>
    %83 = math.tanh %82 : vector<32x256xf32>
    %cst_27 = arith.constant dense<0.000000e+00> : vector<32x256xf32>
    %84 = tpu.matmul %6, %83, %cst_27 {dimension_numbers = #tpu.dot_dimension_numbers<[1], [0], [0], [1], [0, 0, 1, 1], [], []>} : vector<32x32xf32>, vector<32x256xf32>, vector<32x256xf32> -> vector<32x256xf32>
    %85 = vector.broadcast %8 : vector<32x1xf32> to vector<32x256xf32>
    %86 = arith.addf %84, %85 : vector<32x256xf32>
    %87 = math.tanh %86 : vector<32x256xf32>
    %88 = vector.broadcast %9 : vector<32x1xf32> to vector<32x256xf32>
    %89 = arith.mulf %87, %88 : vector<32x256xf32>
    %cst_28 = arith.constant dense<0.000000e+00> : vector<256xf32>
    %90 = vector.multi_reduction <add>, %89, %cst_28 [0] : vector<32x256xf32> to vector<256xf32>
    %91 = vector.shape_cast %90 : vector<256xf32> to vector<1x256xf32>
    %92 = vector.broadcast %10 : vector<1x1xf32> to vector<1x256xf32>
    %93 = arith.addf %91, %92 : vector<1x256xf32>
    %c0_29 = arith.constant 0 : index
    %c512_30 = arith.constant 512 : index
    %94 = vector.load %arg4[%c0_29, %c512_30] : memref<1x1024xf32, #tpu.memory_space<vmem>>, vector<1x256xf32>
    tpu.vector_store %arg4[%c0_29, %c512_30], %93 {strides = array<i32>} : memref<1x1024xf32, #tpu.memory_space<vmem>>, vector<1x256xf32>,
    %c0_31 = arith.constant 0 : index
    %c768 = arith.constant 768 : index
    %95 = vector.load %arg1[%c0_31, %c768] : memref<2x1024xf32, #tpu.memory_space<vmem>>, vector<2x256xf32>
    %96 = vector.extract_strided_slice %95 {offsets = [0, 0], sizes = [1, 256], strides = [1, 1]} : vector<2x256xf32> to vector<1x256xf32>
    %97 = vector.broadcast %0 : vector<32x1xf32> to vector<32x256xf32>
    %98 = vector.broadcast %96 : vector<1x256xf32> to vector<32x256xf32>
    %99 = arith.mulf %97, %98 : vector<32x256xf32>
    %100 = vector.broadcast %2 : vector<32x1xf32> to vector<32x256xf32>
    %101 = arith.addf %100, %99 : vector<32x256xf32>
    %102 = vector.extract_strided_slice %95 {offsets = [1, 0], sizes = [1, 256], strides = [1, 1]} : vector<2x256xf32> to vector<1x256xf32>
    %103 = vector.broadcast %1 : vector<32x1xf32> to vector<32x256xf32>
    %104 = vector.broadcast %102 : vector<1x256xf32> to vector<32x256xf32>
    %105 = arith.mulf %103, %104 : vector<32x256xf32>
    %106 = arith.addf %101, %105 : vector<32x256xf32>
    %107 = math.tanh %106 : vector<32x256xf32>
    %cst_32 = arith.constant dense<0.000000e+00> : vector<32x256xf32>
    %108 = tpu.matmul %4, %107, %cst_32 {dimension_numbers = #tpu.dot_dimension_numbers<[1], [0], [0], [1], [0, 0, 1, 1], [], []>} : vector<32x32xf32>, vector<32x256xf32>, vector<32x256xf32> -> vector<32x256xf32>
    %109 = vector.broadcast %7 : vector<32x1xf32> to vector<32x256xf32>
    %110 = arith.addf %108, %109 : vector<32x256xf32>
    %111 = math.tanh %110 : vector<32x256xf32>
    %cst_33 = arith.constant dense<0.000000e+00> : vector<32x256xf32>
    %112 = tpu.matmul %6, %111, %cst_33 {dimension_numbers = #tpu.dot_dimension_numbers<[1], [0], [0], [1], [0, 0, 1, 1], [], []>} : vector<32x32xf32>, vector<32x256xf32>, vector<32x256xf32> -> vector<32x256xf32>
    %113 = vector.broadcast %8 : vector<32x1xf32> to vector<32x256xf32>
    %114 = arith.addf %112, %113 : vector<32x256xf32>
    %115 = math.tanh %114 : vector<32x256xf32>
    %116 = vector.broadcast %9 : vector<32x1xf32> to vector<32x256xf32>
    %117 = arith.mulf %115, %116 : vector<32x256xf32>
    %cst_34 = arith.constant dense<0.000000e+00> : vector<256xf32>
    %118 = vector.multi_reduction <add>, %117, %cst_34 [0] : vector<32x256xf32> to vector<256xf32>
    %119 = vector.shape_cast %118 : vector<256xf32> to vector<1x256xf32>
    %120 = vector.broadcast %10 : vector<1x1xf32> to vector<1x256xf32>
    %121 = arith.addf %119, %120 : vector<1x256xf32>
    %c0_35 = arith.constant 0 : index
    %c768_36 = arith.constant 768 : index
    %122 = vector.load %arg4[%c0_35, %c768_36] : memref<1x1024xf32, #tpu.memory_space<vmem>>, vector<1x256xf32>
    tpu.vector_store %arg4[%c0_35, %c768_36], %121 {strides = array<i32>} : memref<1x1024xf32, #tpu.memory_space<vmem>>, vector<1x256xf32>,
    return
  }
  func.func @transform_0(%arg0: i32) -> (i32, i32) {
    %c0_i32 = arith.constant 0 : i32
    %c0_i32_0 = arith.constant 0 : i32
    return %c0_i32, %arg0 : i32, i32
  }
  func.func @transform_1(%arg0: i32) -> (i32, i32) {
    %c0_i32 = arith.constant 0 : i32
    %c0_i32_0 = arith.constant 0 : i32
    %c0_i32_1 = arith.constant 0 : i32
    return %c0_i32, %c0_i32_0 : i32, i32
  }
  func.func @transform_2(%arg0: i32) -> (i32, i32, i32) {
    %c0_i32 = arith.constant 0 : i32
    %c0_i32_0 = arith.constant 0 : i32
    %c0_i32_1 = arith.constant 0 : i32
    %c0_i32_2 = arith.constant 0 : i32
    return %c0_i32, %c0_i32_0, %c0_i32_1 : i32, i32, i32
  }
  func.func @transform_3(%arg0: i32) -> (i32, i32) {
    %c0_i32 = arith.constant 0 : i32
    %c0_i32_0 = arith.constant 0 : i32
    return %c0_i32, %arg0 : i32, i32
  }
}

</mosaic_0001>

<llo_original>
// kernel: tpu_custom_call.1
$region0: #{tpu_custom_call.1}
  #allocation0 [shape = 'u32[]', space=smem, size = 0x4, offset = 0x4, fixed_abs, tag = 'smem constant byte address 0x4 - core index']
  #allocation1 [shape = 'u32[144,128]{1,0:T(1,128)}', space=vmem, size = 0x12000, scoped, tag = 'internal scratch']
  %s0 = inlined_call_operand.vmem [shape: f32[2,1024], index: 0, kind: input, shape index: {}]
  %s1 = inlined_call_operand.vmem [shape: f32[32,7], index: 1, kind: input, shape index: {}]
  %s2 = inlined_call_operand.hbm [shape: f32[2,32,32], index: 2, kind: input, shape index: {}]
  %s3 = inlined_call_operand.hbm [shape: f32[1,1024], index: 3, kind: output, shape index: {}]
  %s4 = sld [smem:[#allocation0]]
  $region26: #{tpu_custom_call.1} parent=0
    _
  %s6 = ssub.s32 1, %s4
  %s7 = scalar_select 0, %s6, %s4
  $region1: #{tpu_custom_call.1} parent=0
    #allocation2 [shape = 'u8[32768]{0}', space=vmem, size = 0x8000, scoped, tag = 'input window, operand 2, single buffered']
    #allocation3 [shape = 's32[1]{0}', space=sflag, size = 0x4, scoped, tag = 'scoped memory for tpu_custom_call.1']
    #allocation4 [shape = 's32[1]{0}', space=sflag, size = 0x4, scoped, tag = 'scoped memory for tpu_custom_call.1']
    #allocation5 [shape = 'u8[4096]{0}', space=vmem, size = 0x1000, scoped, tag = 'output window, operand 0, single buffered']
    %8 = vsyncpa [#allocation3], 0
    %9 = vsyncpa [#allocation4], 0
    // Predicated region
    $region2: #{tpu_custom_call.1} parent=1 // pred_check
      _
    $region3: #{tpu_custom_call.1} parent=1 // pred_check_branch
      %11 = sbr.rel (0) target = $region5
    $region4: #{tpu_custom_call.1} parent=1 // pred_region
      _
    $region5: #{tpu_custom_call.1} parent=1 // pred_fallthru
      _
    // Predicated region
    $region6: #{tpu_custom_call.1} parent=1 // pred_check
      _
    $region7: #{tpu_custom_call.1} parent=1 // pred_check_branch
      %13 = sbr.rel (0) target = $region9
    $region8: #{tpu_custom_call.1} parent=1 // pred_region
      _
    $region9: #{tpu_custom_call.1} parent=1 // pred_fallthru
      _
    // Predicated region
    $region10: #{tpu_custom_call.1} parent=1 // pred_check
      _
    $region11: #{tpu_custom_call.1} parent=1 // pred_check_branch
      %15 = sbr.rel (0) target = $region13
    $region12: #{tpu_custom_call.1} parent=1 // pred_region
      %s17 = ssub.s32 1024, 1024
      %18 = vsyncadd [#allocation3], %s17
      %s19 = sshll.u32 [#allocation2], 4
      %s20 = int_to_ptr.vmem [resolvable:$true] %s19
      %25 = dma.hbm_to_vmem [thread:$0]  %s2, 1024, %s20, [#allocation3], 128, 128, 8
    $region13: #{tpu_custom_call.1} parent=1 // pred_fallthru
      _
    // Predicated region
    $region14: #{tpu_custom_call.1} parent=1 // pred_check
      _
    $region15: #{tpu_custom_call.1} parent=1 // pred_check_branch
      %27 = sbr.rel (0) target = $region17
    $region16: #{tpu_custom_call.1} parent=1 // pred_region
      %28 = dma.done [#allocation3], 1024
    $region17: #{tpu_custom_call.1} parent=1 // pred_fallthru
      _
    %v29 = vld [vmem:[%s1] sm:$0xff]
    %v30 = vld [vmem:[%s1 + $0x8] sm:$0xff]
    %v31 = vld [vmem:[%s1 + $0x10] sm:$0xff]
    %v32 = vld [vmem:[%s1 + $0x18] sm:$0xff]
    %v33 = vld [vmem:[#allocation2] sm:$0xff]
    %v34 = vld [vmem:[#allocation2 + $0x8] sm:$0xff]
    %v35 = vld [vmem:[#allocation2 + $0x10] sm:$0xff]
    %v36 = vld [vmem:[#allocation2 + $0x18] sm:$0xff]
    %s37 = scalar_lea.vmem [#allocation2], 32
    %v38 = vld [vmem:[%s37] sm:$0xff]
    %v39 = vld [vmem:[%s37 + $0x8] sm:$0xff]
    %v40 = vld [vmem:[%s37 + $0x10] sm:$0xff]
    %v41 = vld [vmem:[%s37 + $0x18] sm:$0xff]
    %v42 = vld [vmem:[%s1] sm:$0x1]
    %v43 = vld [vmem:[%s0] sm:$0xf]
    %45 = vset.pattern.permute.xlu0 0
    %46 = vperm.xlu0 %45, %v29
    %v47 = vpop.permute.xlu0 %46
    %50 = vset.pattern.permute.xlu0 0
    %51 = vperm.xlu0 %50, %v30
    %v52 = vpop.permute.xlu0 %51
    %55 = vset.pattern.permute.xlu0 0
    %56 = vperm.xlu0 %55, %v31
    %v57 = vpop.permute.xlu0 %56
    %60 = vset.pattern.permute.xlu0 0
    %61 = vperm.xlu0 %60, %v32
    %v62 = vpop.permute.xlu0 %61
    %v65 = vlaneseq
    %v66 = vshrl.u32 %v65, 7
    %v67 = vsub.s32 0, %v66
    %v68 = vrot.slane %v43, %v67
    %v69 = vlaneseq
    %v70 = vshrl.u32 %v69, 7
    %v71 = vsub.s32 2, %v70
    %v72 = vrot.slane %v43, %v71
    %v75 = vlaneseq
    %v76 = vshrl.u32 %v75, 7
    %v77 = vsub.s32 0, %v76
    %v78 = vrot.slane %v68, %v77
    %v79 = vlaneseq
    %v80 = vshrl.u32 %v79, 7
    %v81 = vsub.s32 0, %v80
    %v82 = vrot.slane %v72, %v81
    %v83 = vmul.f32 %v47, %v78
    %v84 = vmul.f32 %v47, %v82
    %v85 = vmul.f32 %v52, %v78
    %v86 = vmul.f32 %v52, %v82
    %v87 = vmul.f32 %v57, %v78
    %v88 = vmul.f32 %v57, %v82
    %v89 = vmul.f32 %v62, %v78
    %v90 = vmul.f32 %v62, %v82
    %91 = vset.pattern.permute.xlu0 2
    %92 = vperm.xlu0 %91, %v29
    %v93 = vpop.permute.xlu0 %92
    %95 = vset.pattern.permute.xlu0 2
    %96 = vperm.xlu0 %95, %v30
    %v97 = vpop.permute.xlu0 %96
    %99 = vset.pattern.permute.xlu0 2
    %100 = vperm.xlu0 %99, %v31
    %v101 = vpop.permute.xlu0 %100
    %103 = vset.pattern.permute.xlu0 2
    %104 = vperm.xlu0 %103, %v32
    %v105 = vpop.permute.xlu0 %104
    %v107 = vadd.f32 %v93, %v83
    %v108 = vadd.f32 %v93, %v84
    %v109 = vadd.f32 %v97, %v85
    %v110 = vadd.f32 %v97, %v86
    %v111 = vadd.f32 %v101, %v87
    %v112 = vadd.f32 %v101, %v88
    %v113 = vadd.f32 %v105, %v89
    %v114 = vadd.f32 %v105, %v90
    %115 = vset.pattern.permute.xlu0 1
    %116 = vperm.xlu0 %115, %v29
    %v117 = vpop.permute.xlu0 %116
    %119 = vset.pattern.permute.xlu0 1
    %120 = vperm.xlu0 %119, %v30
    %v121 = vpop.permute.xlu0 %120
    %123 = vset.pattern.permute.xlu0 1
    %124 = vperm.xlu0 %123, %v31
    %v125 = vpop.permute.xlu0 %124
    %127 = vset.pattern.permute.xlu0 1
    %128 = vperm.xlu0 %127, %v32
    %v129 = vpop.permute.xlu0 %128
    %v131 = vlaneseq
    %v132 = vshrl.u32 %v131, 7
    %v133 = vsub.s32 1, %v132
    %v134 = vrot.slane %v43, %v133
    %v135 = vlaneseq
    %v136 = vshrl.u32 %v135, 7
    %v137 = vsub.s32 3, %v136
    %v138 = vrot.slane %v43, %v137
    %v141 = vlaneseq
    %v142 = vshrl.u32 %v141, 7
    %v143 = vsub.s32 1, %v142
    %v144 = vrot.slane %v134, %v143
    %v145 = vlaneseq
    %v146 = vshrl.u32 %v145, 7
    %v147 = vsub.s32 1, %v146
    %v148 = vrot.slane %v138, %v147
    %v149 = vmul.f32 %v117, %v144
    %v150 = vmul.f32 %v117, %v148
    %v151 = vmul.f32 %v121, %v144
    %v152 = vmul.f32 %v121, %v148
    %v153 = vmul.f32 %v125, %v144
    %v154 = vmul.f32 %v125, %v148
    %v155 = vmul.f32 %v129, %v144
    %v156 = vmul.f32 %v129, %v148
    %v157 = vadd.f32 %v107, %v149
    %v158 = vadd.f32 %v108, %v150
    %v159 = vadd.f32 %v109, %v151
    %v160 = vadd.f32 %v110, %v152
    %v161 = vadd.f32 %v111, %v153
    %v162 = vadd.f32 %v112, %v154
    %v163 = vadd.f32 %v113, %v155
    %v164 = vadd.f32 %v114, %v156
    %v165 = vtanh.pop %v157
    %v166 = vtanh.pop %v158
    %v167 = vtanh.pop %v159
    %v168 = vtanh.pop %v160
    %v169 = vtanh.pop %v161
    %v170 = vtanh.pop %v162
    %v171 = vtanh.pop %v163
    %v172 = vtanh.pop %v164
    %173 = vset.pattern.permute.xlu0 3
    %174 = vperm.xlu0 %173, %v29
    %v175 = vpop.permute.xlu0 %174
    %177 = vset.pattern.permute.xlu0 3
    %178 = vperm.xlu0 %177, %v30
    %v179 = vpop.permute.xlu0 %178
    %181 = vset.pattern.permute.xlu0 3
    %182 = vperm.xlu0 %181, %v31
    %v183 = vpop.permute.xlu0 %182
    %185 = vset.pattern.permute.xlu0 3
    %186 = vperm.xlu0 %185, %v32
    %v187 = vpop.permute.xlu0 %186
    %vm189 = vcmask 261120
    %v191 = vsel %vm189, %v33, 0
    %v194 = vsel %vm189, %v34, 0
    %v197 = vsel %vm189, %v35, 0
    %v200 = vsel %vm189, %v36, 0
    %202 = vmatprep.subr.mxu0 %v166
    %203 = vmatpush1.msra.mxu0 %v165
    %204 = vmatprep.subr.mxu0 %v168
    %205 = vmatpush1.msra.mxu0 %v167
    %206 = vmatprep.subr.mxu0 %v170
    %207 = vmatpush1.msra.mxu0 %v169
    %208 = vmatprep.subr.mxu0 %v172
    %209 = vmatpush1.msra.mxu0 %v171
    %210 = vmatprep.subr.mxu0 0.0
    %211 = vmatpush1.msra.mxu0 0.0
    %212 = vmatprep.subr.mxu0 0.0
    %213 = vmatpush1.msra.mxu0 0.0
    %214 = vmatprep.subr.mxu0 0.0
    %215 = vmatpush1.msra.mxu0 0.0
    %216 = vmatprep.subr.mxu0 0.0
    %217 = vmatpush1.msra.mxu0 0.0
    %218 = vmatprep.subr.mxu0 0.0
    %219 = vmatpush1.msra.mxu0 0.0
    %220 = vmatprep.subr.mxu0 0.0
    %221 = vmatpush1.msra.mxu0 0.0
    %222 = vmatprep.subr.mxu0 0.0
    %223 = vmatpush1.msra.mxu0 0.0
    %224 = vmatprep.subr.mxu0 0.0
    %225 = vmatpush1.msra.mxu0 0.0
    %226 = vmatprep.subr.mxu0 0.0
    %227 = vmatpush1.msra.mxu0 0.0
    %228 = vmatprep.subr.mxu0 0.0
    %229 = vmatpush1.msra.mxu0 0.0
    %230 = vmatprep.subr.mxu0 0.0
    %231 = vmatpush1.msra.mxu0 0.0
    %232 = vmatprep.subr.mxu0 0.0
    %233 = vmatpush1.msra.mxu0 0.0
    %234 = vmatprep.subr.mxu0 0.0
    %235 = vmatpush1.msra.mxu0 0.0
    %236 = vmatprep.subr.mxu0 0.0
    %237 = vmatpush1.msra.mxu0 0.0
    %238 = vmatprep.subr.mxu0 0.0
    %239 = vmatpush1.msra.mxu0 0.0
    %240 = vmatprep.subr.mxu0 0.0
    %241 = vmatpush1.msra.mxu0 0.0
    %242 = vmatprep.subr.mxu0 0.0
    %243 = vmatpush1.msra.mxu0 0.0
    %244 = vmatprep.subr.mxu0 0.0
    %245 = vmatpush1.msra.mxu0 0.0
    %246 = vmatprep.subr.mxu0 0.0
    %247 = vmatpush1.msra.mxu0 0.0
    %248 = vmatprep.subr.mxu0 0.0
    %249 = vmatpush1.msra.mxu0 0.0
    %250 = vmatprep.subr.mxu0 0.0
    %251 = vmatpush1.msra.mxu0 0.0
    %252 = vmatprep.subr.mxu0 0.0
    %253 = vmatpush1.msra.mxu0 0.0
    %254 = vmatprep.subr.mxu0 0.0
    %255 = vmatpush1.msra.mxu0 0.0
    %256 = vmatprep.subr.mxu0 0.0
    %257 = vmatpush1.msra.mxu0 0.0
    %258 = vmatprep.subr.mxu0 0.0
    %259 = vmatpush1.msra.mxu0 0.0
    %260 = vmatprep.subr.mxu0 0.0
    %261 = vmatpush1.msra.mxu0 0.0
    %262 = vmatprep.subr.mxu0 0.0
    %263 = vmatpush1.msra.mxu0 0.0
    %264 = vmatprep.subr.mxu0 0.0
    %265 = vmatpush1.msra.mxu0 0.0
    %266 = vmatprep.mubr.f32.mxu0 0.0
    %267 = vmatmul.mubr.f32.gmra.mrb[0].mxu0 %v191
    %v268 = vpop.f32.mrb[0].mxu0
    %v269 = vadd.f32 %v175, %v268
    %v270 = vpop.f32.mrb[0].mxu0
    %v271 = vadd.f32 %v175, %v270
    %272 = vmatprep.mubr.f32.mxu0 0.0
    %273 = vmatmul.mubr.f32.gmra.mrb[0].mxu0 %v194
    %v274 = vpop.f32.mrb[0].mxu0
    %v275 = vadd.f32 %v179, %v274
    %v276 = vpop.f32.mrb[0].mxu0
    %v277 = vadd.f32 %v179, %v276
    %278 = vmatprep.mubr.f32.mxu0 0.0
    %279 = vmatmul.mubr.f32.gmra.mrb[0].mxu0 %v197
    %v280 = vpop.f32.mrb[0].mxu0
    %v281 = vadd.f32 %v183, %v280
    %v282 = vpop.f32.mrb[0].mxu0
    %v283 = vadd.f32 %v183, %v282
    %284 = vmatprep.mubr.f32.mxu0 0.0
    %285 = vmatmul.mubr.f32.gmra.mrb[0].mxu0 %v200
    %v286 = vpop.f32.mrb[0].mxu0
    %v287 = vadd.f32 %v187, %v286
    %v288 = vpop.f32.mrb[0].mxu0
    %v289 = vadd.f32 %v187, %v288
    %290 = vdwg.mxu0
    %v291 = vtanh.pop %v269
    %v292 = vtanh.pop %v271
    %v293 = vtanh.pop %v275
    %v294 = vtanh.pop %v277
    %v295 = vtanh.pop %v281
    %v296 = vtanh.pop %v283
    %v297 = vtanh.pop %v287
    %v298 = vtanh.pop %v289
    %299 = vset.pattern.permute.xlu0 4
    %300 = vperm.xlu0 %299, %v29
    %v301 = vpop.permute.xlu0 %300
    %303 = vset.pattern.permute.xlu0 4
    %304 = vperm.xlu0 %303, %v30
    %v305 = vpop.permute.xlu0 %304
    %307 = vset.pattern.permute.xlu0 4
    %308 = vperm.xlu0 %307, %v31
    %v309 = vpop.permute.xlu0 %308
    %311 = vset.pattern.permute.xlu0 4
    %312 = vperm.xlu0 %311, %v32
    %v313 = vpop.permute.xlu0 %312
    %v316 = vsel %vm189, %v38, 0
    %v319 = vsel %vm189, %v39, 0
    %v322 = vsel %vm189, %v40, 0
    %v325 = vsel %vm189, %v41, 0
    %327 = vmatprep.subr.mxu0 %v292
    %328 = vmatpush1.msra.mxu0 %v291
    %329 = vmatprep.subr.mxu0 %v294
    %330 = vmatpush1.msra.mxu0 %v293
    %331 = vmatprep.subr.mxu0 %v296
    %332 = vmatpush1.msra.mxu0 %v295
    %333 = vmatprep.subr.mxu0 %v298
    %334 = vmatpush1.msra.mxu0 %v297
    %335 = vmatprep.subr.mxu0 0.0
    %336 = vmatpush1.msra.mxu0 0.0
    %337 = vmatprep.subr.mxu0 0.0
    %338 = vmatpush1.msra.mxu0 0.0
    %339 = vmatprep.subr.mxu0 0.0
    %340 = vmatpush1.msra.mxu0 0.0
    %341 = vmatprep.subr.mxu0 0.0
    %342 = vmatpush1.msra.mxu0 0.0
    %343 = vmatprep.subr.mxu0 0.0
    %344 = vmatpush1.msra.mxu0 0.0
    %345 = vmatprep.subr.mxu0 0.0
    %346 = vmatpush1.msra.mxu0 0.0
    %347 = vmatprep.subr.mxu0 0.0
    %348 = vmatpush1.msra.mxu0 0.0
    %349 = vmatprep.subr.mxu0 0.0
    %350 = vmatpush1.msra.mxu0 0.0
    %351 = vmatprep.subr.mxu0 0.0
    %352 = vmatpush1.msra.mxu0 0.0
    %353 = vmatprep.subr.mxu0 0.0
    %354 = vmatpush1.msra.mxu0 0.0
    %355 = vmatprep.subr.mxu0 0.0
    %356 = vmatpush1.msra.mxu0 0.0
    %357 = vmatprep.subr.mxu0 0.0
    %358 = vmatpush1.msra.mxu0 0.0
    %359 = vmatprep.subr.mxu0 0.0
    %360 = vmatpush1.msra.mxu0 0.0
    %361 = vmatprep.subr.mxu0 0.0
    %362 = vmatpush1.msra.mxu0 0.0
    %363 = vmatprep.subr.mxu0 0.0
    %364 = vmatpush1.msra.mxu0 0.0
    %365 = vmatprep.subr.mxu0 0.0
    %366 = vmatpush1.msra.mxu0 0.0
    %367 = vmatprep.subr.mxu0 0.0
    %368 = vmatpush1.msra.mxu0 0.0
    %369 = vmatprep.subr.mxu0 0.0
    %370 = vmatpush1.msra.mxu0 0.0
    %371 = vmatprep.subr.mxu0 0.0
    %372 = vmatpush1.msra.mxu0 0.0
    %373 = vmatprep.subr.mxu0 0.0
    %374 = vmatpush1.msra.mxu0 0.0
    %375 = vmatprep.subr.mxu0 0.0
    %376 = vmatpush1.msra.mxu0 0.0
    %377 = vmatprep.subr.mxu0 0.0
    %378 = vmatpush1.msra.mxu0 0.0
    %379 = vmatprep.subr.mxu0 0.0
    %380 = vmatpush1.msra.mxu0 0.0
    %381 = vmatprep.subr.mxu0 0.0
    %382 = vmatpush1.msra.mxu0 0.0
    %383 = vmatprep.subr.mxu0 0.0
    %384 = vmatpush1.msra.mxu0 0.0
    %385 = vmatprep.subr.mxu0 0.0
    %386 = vmatpush1.msra.mxu0 0.0
    %387 = vmatprep.subr.mxu0 0.0
    %388 = vmatpush1.msra.mxu0 0.0
    %389 = vmatprep.subr.mxu0 0.0
    %390 = vmatpush1.msra.mxu0 0.0
    %391 = vmatprep.mubr.f32.mxu0 0.0
    %392 = vmatmul.mubr.f32.gmra.mrb[0].mxu0 %v316
    %v393 = vpop.f32.mrb[0].mxu0
    %v394 = vadd.f32 %v301, %v393
    %v395 = vpop.f32.mrb[0].mxu0
    %v396 = vadd.f32 %v301, %v395
    %397 = vmatprep.mubr.f32.mxu0 0.0
    %398 = vmatmul.mubr.f32.gmra.mrb[0].mxu0 %v319
    %v399 = vpop.f32.mrb[0].mxu0
    %v400 = vadd.f32 %v305, %v399
    %v401 = vpop.f32.mrb[0].mxu0
    %v402 = vadd.f32 %v305, %v401
    %403 = vmatprep.mubr.f32.mxu0 0.0
    %404 = vmatmul.mubr.f32.gmra.mrb[0].mxu0 %v322
    %v405 = vpop.f32.mrb[0].mxu0
    %v406 = vadd.f32 %v309, %v405
    %v407 = vpop.f32.mrb[0].mxu0
    %v408 = vadd.f32 %v309, %v407
    %409 = vmatprep.mubr.f32.mxu0 0.0
    %410 = vmatmul.mubr.f32.gmra.mrb[0].mxu0 %v325
    %v411 = vpop.f32.mrb[0].mxu0
    %v412 = vadd.f32 %v313, %v411
    %v413 = vpop.f32.mrb[0].mxu0
    %v414 = vadd.f32 %v313, %v413
    %415 = vdwg.mxu0
    %v416 = vtanh.pop %v394
    %v417 = vtanh.pop %v396
    %v418 = vtanh.pop %v400
    %v419 = vtanh.pop %v402
    %v420 = vtanh.pop %v406
    %v421 = vtanh.pop %v408
    %v422 = vtanh.pop %v412
    %v423 = vtanh.pop %v414
    %424 = vset.pattern.permute.xlu0 5
    %425 = vperm.xlu0 %424, %v29
    %v426 = vpop.permute.xlu0 %425
    %428 = vset.pattern.permute.xlu0 5
    %429 = vperm.xlu0 %428, %v30
    %v430 = vpop.permute.xlu0 %429
    %432 = vset.pattern.permute.xlu0 5
    %433 = vperm.xlu0 %432, %v31
    %v434 = vpop.permute.xlu0 %433
    %436 = vset.pattern.permute.xlu0 5
    %437 = vperm.xlu0 %436, %v32
    %v438 = vpop.permute.xlu0 %437
    %v440 = vmul.f32 %v416, %v426
    %v441 = vmul.f32 %v417, %v426
    %v442 = vmul.f32 %v418, %v430
    %v443 = vmul.f32 %v419, %v430
    %v444 = vmul.f32 %v420, %v434
    %v445 = vmul.f32 %v421, %v434
    %v446 = vmul.f32 %v422, %v438
    %v447 = vmul.f32 %v423, %v438
    %v448 = vadd.f32 %v440, %v442
    %v449 = vadd.f32 %v448, %v444
    %v450 = vadd.f32 %v449, %v446
    %v451 = vrot.slane %v450, 4
    %v452 = vadd.f32 %v450, %v451
    %v453 = vrot.slane %v452, 2
    %v454 = vadd.f32 %v452, %v453
    %v455 = vrot.slane %v454, 1
    %v456 = vadd.f32 %v454, %v455
    %v457 = vadd.f32 %v441, %v443
    %v458 = vadd.f32 %v457, %v445
    %v459 = vadd.f32 %v458, %v447
    %v460 = vrot.slane %v459, 4
    %v461 = vadd.f32 %v459, %v460
    %v462 = vrot.slane %v461, 2
    %v463 = vadd.f32 %v461, %v462
    %v464 = vrot.slane %v463, 1
    %v465 = vadd.f32 %v463, %v464
    %467 = vset.pattern.permute.xlu0 6
    %468 = vperm.xlu0 %467, %v42
    %v469 = vpop.permute.xlu0 %468
    %v471 = vadd.f32 %v456, %v469
    %v472 = vadd.f32 %v465, %v469
    %v475 = vcombine.low %v471, %v472
    %v477 = vunpack.c.l.s4 1966171168
    %v478 = vunpack.c.0.s8 %v477
    %v479 = vlaneseq
    %v480 = vshrl.u32 %v479, 7
    %v481 = vsub.s32 %v478, %v480
    %v482 = vrot.slane %v475, %v481
    %v484 = vunpack.c.l.s4 1966171168
    %v485 = vunpack.c.0.s8 %v484
    %v486 = vlaneseq
    %v487 = vshrl.u32 %v486, 7
    %v488 = vsub.s32 %v485, %v487
    %v489 = vrot.slane %v482, %v488
    %v491 = vlaneseq
    %vm492 = vcmp.ge.s32.totalorder %v491, 0
    %vm493 = vcmp.lt.s32.totalorder %v491, 256
    %vm494 = vmand %vm492, %vm493
    %495 = vst.msk [vmem:[#allocation5] sm:$0x3] %vm494, %v489
    %v496 = vld [vmem:[%s0 + $0x4] sm:$0xf]
    %v498 = vlaneseq
    %v499 = vshrl.u32 %v498, 7
    %v500 = vsub.s32 0, %v499
    %v501 = vrot.slane %v496, %v500
    %v502 = vlaneseq
    %v503 = vshrl.u32 %v502, 7
    %v504 = vsub.s32 2, %v503
    %v505 = vrot.slane %v496, %v504
    %v508 = vlaneseq
    %v509 = vshrl.u32 %v508, 7
    %v510 = vsub.s32 0, %v509
    %v511 = vrot.slane %v501, %v510
    %v512 = vlaneseq
    %v513 = vshrl.u32 %v512, 7
    %v514 = vsub.s32 0, %v513
    %v515 = vrot.slane %v505, %v514
    %v516 = vmul.f32 %v47, %v511
    %v517 = vmul.f32 %v47, %v515
    %v518 = vmul.f32 %v52, %v511
    %v519 = vmul.f32 %v52, %v515
    %v520 = vmul.f32 %v57, %v511
    %v521 = vmul.f32 %v57, %v515
    %v522 = vmul.f32 %v62, %v511
    %v523 = vmul.f32 %v62, %v515
    %v524 = vadd.f32 %v93, %v516
    %v525 = vadd.f32 %v93, %v517
    %v526 = vadd.f32 %v97, %v518
    %v527 = vadd.f32 %v97, %v519
    %v528 = vadd.f32 %v101, %v520
    %v529 = vadd.f32 %v101, %v521
    %v530 = vadd.f32 %v105, %v522
    %v531 = vadd.f32 %v105, %v523
    %v532 = vlaneseq
    %v533 = vshrl.u32 %v532, 7
    %v534 = vsub.s32 1, %v533
    %v535 = vrot.slane %v496, %v534
    %v536 = vlaneseq
    %v537 = vshrl.u32 %v536, 7
    %v538 = vsub.s32 3, %v537
    %v539 = vrot.slane %v496, %v538
    %v542 = vlaneseq
    %v543 = vshrl.u32 %v542, 7
    %v544 = vsub.s32 1, %v543
    %v545 = vrot.slane %v535, %v544
    %v546 = vlaneseq
    %v547 = vshrl.u32 %v546, 7
    %v548 = vsub.s32 1, %v547
    %v549 = vrot.slane %v539, %v548
    %v550 = vmul.f32 %v117, %v545
    %v551 = vmul.f32 %v117, %v549
    %v552 = vmul.f32 %v121, %v545
    %v553 = vmul.f32 %v121, %v549
    %v554 = vmul.f32 %v125, %v545
    %v555 = vmul.f32 %v125, %v549
    %v556 = vmul.f32 %v129, %v545
    %v557 = vmul.f32 %v129, %v549
    %v558 = vadd.f32 %v524, %v550
    %v559 = vadd.f32 %v525, %v551
    %v560 = vadd.f32 %v526, %v552
    %v561 = vadd.f32 %v527, %v553
    %v562 = vadd.f32 %v528, %v554
    %v563 = vadd.f32 %v529, %v555
    %v564 = vadd.f32 %v530, %v556
    %v565 = vadd.f32 %v531, %v557
    %v566 = vtanh.pop %v558
    %v567 = vtanh.pop %v559
    %v568 = vtanh.pop %v560
    %v569 = vtanh.pop %v561
    %v570 = vtanh.pop %v562
    %v571 = vtanh.pop %v563
    %v572 = vtanh.pop %v564
    %v573 = vtanh.pop %v565
    %574 = vmatprep.subr.mxu0 %v567
    %575 = vmatpush1.msra.mxu0 %v566
    %576 = vmatprep.subr.mxu0 %v569
    %577 = vmatpush1.msra.mxu0 %v568
    %578 = vmatprep.subr.mxu0 %v571
    %579 = vmatpush1.msra.mxu0 %v570
    %580 = vmatprep.subr.mxu0 %v573
    %581 = vmatpush1.msra.mxu0 %v572
    %582 = vmatprep.subr.mxu0 0.0
    %583 = vmatpush1.msra.mxu0 0.0
    %584 = vmatprep.subr.mxu0 0.0
    %585 = vmatpush1.msra.mxu0 0.0
    %586 = vmatprep.subr.mxu0 0.0
    %587 = vmatpush1.msra.mxu0 0.0
    %588 = vmatprep.subr.mxu0 0.0
    %589 = vmatpush1.msra.mxu0 0.0
    %590 = vmatprep.subr.mxu0 0.0
    %591 = vmatpush1.msra.mxu0 0.0
    %592 = vmatprep.subr.mxu0 0.0
    %593 = vmatpush1.msra.mxu0 0.0
    %594 = vmatprep.subr.mxu0 0.0
    %595 = vmatpush1.msra.mxu0 0.0
    %596 = vmatprep.subr.mxu0 0.0
    %597 = vmatpush1.msra.mxu0 0.0
    %598 = vmatprep.subr.mxu0 0.0
    %599 = vmatpush1.msra.mxu0 0.0
    %600 = vmatprep.subr.mxu0 0.0
    %601 = vmatpush1.msra.mxu0 0.0
    %602 = vmatprep.subr.mxu0 0.0
    %603 = vmatpush1.msra.mxu0 0.0
    %604 = vmatprep.subr.mxu0 0.0
    %605 = vmatpush1.msra.mxu0 0.0
    %606 = vmatprep.subr.mxu0 0.0
    %607 = vmatpush1.msra.mxu0 0.0
    %608 = vmatprep.subr.mxu0 0.0
    %609 = vmatpush1.msra.mxu0 0.0
    %610 = vmatprep.subr.mxu0 0.0
    %611 = vmatpush1.msra.mxu0 0.0
    %612 = vmatprep.subr.mxu0 0.0
    %613 = vmatpush1.msra.mxu0 0.0
    %614 = vmatprep.subr.mxu0 0.0
    %615 = vmatpush1.msra.mxu0 0.0
    %616 = vmatprep.subr.mxu0 0.0
    %617 = vmatpush1.msra.mxu0 0.0
    %618 = vmatprep.subr.mxu0 0.0
    %619 = vmatpush1.msra.mxu0 0.0
    %620 = vmatprep.subr.mxu0 0.0
    %621 = vmatpush1.msra.mxu0 0.0
    %622 = vmatprep.subr.mxu0 0.0
    %623 = vmatpush1.msra.mxu0 0.0
    %624 = vmatprep.subr.mxu0 0.0
    %625 = vmatpush1.msra.mxu0 0.0
    %626 = vmatprep.subr.mxu0 0.0
    %627 = vmatpush1.msra.mxu0 0.0
    %628 = vmatprep.subr.mxu0 0.0
    %629 = vmatpush1.msra.mxu0 0.0
    %630 = vmatprep.subr.mxu0 0.0
    %631 = vmatpush1.msra.mxu0 0.0
    %632 = vmatprep.subr.mxu0 0.0
    %633 = vmatpush1.msra.mxu0 0.0
    %634 = vmatprep.subr.mxu0 0.0
    %635 = vmatpush1.msra.mxu0 0.0
    %636 = vmatprep.subr.mxu0 0.0
    %637 = vmatpush1.msra.mxu0 0.0
    %638 = vmatprep.mubr.f32.mxu0 0.0
    %639 = vmatmul.mubr.f32.gmra.mrb[0].mxu0 %v191
    %v640 = vpop.f32.mrb[0].mxu0
    %v641 = vadd.f32 %v175, %v640
    %v642 = vpop.f32.mrb[0].mxu0
    %v643 = vadd.f32 %v175, %v642
    %644 = vmatprep.mubr.f32.mxu0 0.0
    %645 = vmatmul.mubr.f32.gmra.mrb[0].mxu0 %v194
    %v646 = vpop.f32.mrb[0].mxu0
    %v647 = vadd.f32 %v179, %v646
    %v648 = vpop.f32.mrb[0].mxu0
    %v649 = vadd.f32 %v179, %v648
    %650 = vmatprep.mubr.f32.mxu0 0.0
    %651 = vmatmul.mubr.f32.gmra.mrb[0].mxu0 %v197
    %v652 = vpop.f32.mrb[0].mxu0
    %v653 = vadd.f32 %v183, %v652
    %v654 = vpop.f32.mrb[0].mxu0
    %v655 = vadd.f32 %v183, %v654
    %656 = vmatprep.mubr.f32.mxu0 0.0
    %657 = vmatmul.mubr.f32.gmra.mrb[0].mxu0 %v200
    %v658 = vpop.f32.mrb[0].mxu0
    %v659 = vadd.f32 %v187, %v658
    %v660 = vpop.f32.mrb[0].mxu0
    %v661 = vadd.f32 %v187, %v660
    %662 = vdwg.mxu0
    %v663 = vtanh.pop %v641
    %v664 = vtanh.pop %v643
    %v665 = vtanh.pop %v647
    %v666 = vtanh.pop %v649
    %v667 = vtanh.pop %v653
    %v668 = vtanh.pop %v655
    %v669 = vtanh.pop %v659
    %v670 = vtanh.pop %v661
    %671 = vmatprep.subr.mxu0 %v664
    %672 = vmatpush1.msra.mxu0 %v663
    %673 = vmatprep.subr.mxu0 %v666
    %674 = vmatpush1.msra.mxu0 %v665
    %675 = vmatprep.subr.mxu0 %v668
    %676 = vmatpush1.msra.mxu0 %v667
    %677 = vmatprep.subr.mxu0 %v670
    %678 = vmatpush1.msra.mxu0 %v669
    %679 = vmatprep.subr.mxu0 0.0
    %680 = vmatpush1.msra.mxu0 0.0
    %681 = vmatprep.subr.mxu0 0.0
    %682 = vmatpush1.msra.mxu0 0.0
    %683 = vmatprep.subr.mxu0 0.0
    %684 = vmatpush1.msra.mxu0 0.0
    %685 = vmatprep.subr.mxu0 0.0
    %686 = vmatpush1.msra.mxu0 0.0
    %687 = vmatprep.subr.mxu0 0.0
    %688 = vmatpush1.msra.mxu0 0.0
    %689 = vmatprep.subr.mxu0 0.0
    %690 = vmatpush1.msra.mxu0 0.0
    %691 = vmatprep.subr.mxu0 0.0
    %692 = vmatpush1.msra.mxu0 0.0
    %693 = vmatprep.subr.mxu0 0.0
    %694 = vmatpush1.msra.mxu0 0.0
    %695 = vmatprep.subr.mxu0 0.0
    %696 = vmatpush1.msra.mxu0 0.0
    %697 = vmatprep.subr.mxu0 0.0
    %698 = vmatpush1.msra.mxu0 0.0
    %699 = vmatprep.subr.mxu0 0.0
    %700 = vmatpush1.msra.mxu0 0.0
    %701 = vmatprep.subr.mxu0 0.0
    %702 = vmatpush1.msra.mxu0 0.0
    %703 = vmatprep.subr.mxu0 0.0
    %704 = vmatpush1.msra.mxu0 0.0
    %705 = vmatprep.subr.mxu0 0.0
    %706 = vmatpush1.msra.mxu0 0.0
    %707 = vmatprep.subr.mxu0 0.0
    %708 = vmatpush1.msra.mxu0 0.0
    %709 = vmatprep.subr.mxu0 0.0
    %710 = vmatpush1.msra.mxu0 0.0
    %711 = vmatprep.subr.mxu0 0.0
    %712 = vmatpush1.msra.mxu0 0.0
    %713 = vmatprep.subr.mxu0 0.0
    %714 = vmatpush1.msra.mxu0 0.0
    %715 = vmatprep.subr.mxu0 0.0
    %716 = vmatpush1.msra.mxu0 0.0
    %717 = vmatprep.subr.mxu0 0.0
    %718 = vmatpush1.msra.mxu0 0.0
    %719 = vmatprep.subr.mxu0 0.0
    %720 = vmatpush1.msra.mxu0 0.0
    %721 = vmatprep.subr.mxu0 0.0
    %722 = vmatpush1.msra.mxu0 0.0
    %723 = vmatprep.subr.mxu0 0.0
    %724 = vmatpush1.msra.mxu0 0.0
    %725 = vmatprep.subr.mxu0 0.0
    %726 = vmatpush1.msra.mxu0 0.0
    %727 = vmatprep.subr.mxu0 0.0
    %728 = vmatpush1.msra.mxu0 0.0
    %729 = vmatprep.subr.mxu0 0.0
    %730 = vmatpush1.msra.mxu0 0.0
    %731 = vmatprep.subr.mxu0 0.0
    %732 = vmatpush1.msra.mxu0 0.0
    %733 = vmatprep.subr.mxu0 0.0
    %734 = vmatpush1.msra.mxu0 0.0
    %735 = vmatprep.mubr.f32.mxu0 0.0
    %736 = vmatmul.mubr.f32.gmra.mrb[0].mxu0 %v316
    %v737 = vpop.f32.mrb[0].mxu0
    %v738 = vadd.f32 %v301, %v737
    %v739 = vpop.f32.mrb[0].mxu0
    %v740 = vadd.f32 %v301, %v739
    %741 = vmatprep.mubr.f32.mxu0 0.0
    %742 = vmatmul.mubr.f32.gmra.mrb[0].mxu0 %v319
    %v743 = vpop.f32.mrb[0].mxu0
    %v744 = vadd.f32 %v305, %v743
    %v745 = vpop.f32.mrb[0].mxu0
    %v746 = vadd.f32 %v305, %v745
    %747 = vmatprep.mubr.f32.mxu0 0.0
    %748 = vmatmul.mubr.f32.gmra.mrb[0].mxu0 %v322
    %v749 = vpop.f32.mrb[0].mxu0
    %v750 = vadd.f32 %v309, %v749
    %v751 = vpop.f32.mrb[0].mxu0
    %v752 = vadd.f32 %v309, %v751
    %753 = vmatprep.mubr.f32.mxu0 0.0
    %754 = vmatmul.mubr.f32.gmra.mrb[0].mxu0 %v325
    %v755 = vpop.f32.mrb[0].mxu0
    %v756 = vadd.f32 %v313, %v755
    %v757 = vpop.f32.mrb[0].mxu0
    %v758 = vadd.f32 %v313, %v757
    %759 = vdwg.mxu0
    %v760 = vtanh.pop %v738
    %v761 = vtanh.pop %v740
    %v762 = vtanh.pop %v744
    %v763 = vtanh.pop %v746
    %v764 = vtanh.pop %v750
    %v765 = vtanh.pop %v752
    %v766 = vtanh.pop %v756
    %v767 = vtanh.pop %v758
    %v768 = vmul.f32 %v760, %v426
    %v769 = vmul.f32 %v761, %v426
    %v770 = vmul.f32 %v762, %v430
    %v771 = vmul.f32 %v763, %v430
    %v772 = vmul.f32 %v764, %v434
    %v773 = vmul.f32 %v765, %v434
    %v774 = vmul.f32 %v766, %v438
    %v775 = vmul.f32 %v767, %v438
    %v776 = vadd.f32 %v768, %v770
    %v777 = vadd.f32 %v776, %v772
    %v778 = vadd.f32 %v777, %v774
    %v779 = vrot.slane %v778, 4
    %v780 = vadd.f32 %v778, %v779
    %v781 = vrot.slane %v780, 2
    %v782 = vadd.f32 %v780, %v781
    %v783 = vrot.slane %v782, 1
    %v784 = vadd.f32 %v782, %v783
    %v785 = vadd.f32 %v769, %v771
    %v786 = vadd.f32 %v785, %v773
    %v787 = vadd.f32 %v786, %v775
    %v788 = vrot.slane %v787, 4
    %v789 = vadd.f32 %v787, %v788
    %v790 = vrot.slane %v789, 2
    %v791 = vadd.f32 %v789, %v790
    %v792 = vrot.slane %v791, 1
    %v793 = vadd.f32 %v791, %v792
    %v794 = vadd.f32 %v784, %v469
    %v795 = vadd.f32 %v793, %v469
    %v798 = vcombine.low %v794, %v795
    %v800 = vunpack.c.l.s4 1966171168
    %v801 = vunpack.c.0.s8 %v800
    %v802 = vlaneseq
    %v803 = vshrl.u32 %v802, 7
    %v804 = vsub.s32 %v801, %v803
    %v805 = vrot.slane %v798, %v804
    %v807 = vunpack.c.l.s4 1966171168
    %v808 = vunpack.c.0.s8 %v807
    %v809 = vlaneseq
    %v810 = vshrl.u32 %v809, 7
    %v811 = vsub.s32 %v808, %v810
    %v812 = vrot.slane %v805, %v811
    %814 = vst.msk [vmem:[#allocation5 + $0x2] sm:$0x3] %vm494, %v812
    %v815 = vld [vmem:[%s0 + $0x8] sm:$0xf]
    %v817 = vlaneseq
    %v818 = vshrl.u32 %v817, 7
    %v819 = vsub.s32 0, %v818
    %v820 = vrot.slane %v815, %v819
    %v821 = vlaneseq
    %v822 = vshrl.u32 %v821, 7
    %v823 = vsub.s32 2, %v822
    %v824 = vrot.slane %v815, %v823
    %v827 = vlaneseq
    %v828 = vshrl.u32 %v827, 7
    %v829 = vsub.s32 0, %v828
    %v830 = vrot.slane %v820, %v829
    %v831 = vlaneseq
    %v832 = vshrl.u32 %v831, 7
    %v833 = vsub.s32 0, %v832
    %v834 = vrot.slane %v824, %v833
    %v835 = vmul.f32 %v47, %v830
    %v836 = vmul.f32 %v47, %v834
    %v837 = vmul.f32 %v52, %v830
    %v838 = vmul.f32 %v52, %v834
    %v839 = vmul.f32 %v57, %v830
    %v840 = vmul.f32 %v57, %v834
    %v841 = vmul.f32 %v62, %v830
    %v842 = vmul.f32 %v62, %v834
    %v843 = vadd.f32 %v93, %v835
    %v844 = vadd.f32 %v93, %v836
    %v845 = vadd.f32 %v97, %v837
    %v846 = vadd.f32 %v97, %v838
    %v847 = vadd.f32 %v101, %v839
    %v848 = vadd.f32 %v101, %v840
    %v849 = vadd.f32 %v105, %v841
    %v850 = vadd.f32 %v105, %v842
    %v851 = vlaneseq
    %v852 = vshrl.u32 %v851, 7
    %v853 = vsub.s32 1, %v852
    %v854 = vrot.slane %v815, %v853
    %v855 = vlaneseq
    %v856 = vshrl.u32 %v855, 7
    %v857 = vsub.s32 3, %v856
    %v858 = vrot.slane %v815, %v857
    %v861 = vlaneseq
    %v862 = vshrl.u32 %v861, 7
    %v863 = vsub.s32 1, %v862
    %v864 = vrot.slane %v854, %v863
    %v865 = vlaneseq
    %v866 = vshrl.u32 %v865, 7
    %v867 = vsub.s32 1, %v866
    %v868 = vrot.slane %v858, %v867
    %v869 = vmul.f32 %v117, %v864
    %v870 = vmul.f32 %v117, %v868
    %v871 = vmul.f32 %v121, %v864
    %v872 = vmul.f32 %v121, %v868
    %v873 = vmul.f32 %v125, %v864
    %v874 = vmul.f32 %v125, %v868
    %v875 = vmul.f32 %v129, %v864
    %v876 = vmul.f32 %v129, %v868
    %v877 = vadd.f32 %v843, %v869
    %v878 = vadd.f32 %v844, %v870
    %v879 = vadd.f32 %v845, %v871
    %v880 = vadd.f32 %v846, %v872
    %v881 = vadd.f32 %v847, %v873
    %v882 = vadd.f32 %v848, %v874
    %v883 = vadd.f32 %v849, %v875
    %v884 = vadd.f32 %v850, %v876
    %v885 = vtanh.pop %v877
    %v886 = vtanh.pop %v878
    %v887 = vtanh.pop %v879
    %v888 = vtanh.pop %v880
    %v889 = vtanh.pop %v881
    %v890 = vtanh.pop %v882
    %v891 = vtanh.pop %v883
    %v892 = vtanh.pop %v884
    %893 = vmatprep.subr.mxu0 %v886
    %894 = vmatpush1.msra.mxu0 %v885
    %895 = vmatprep.subr.mxu0 %v888
    %896 = vmatpush1.msra.mxu0 %v887
    %897 = vmatprep.subr.mxu0 %v890
    %898 = vmatpush1.msra.mxu0 %v889
    %899 = vmatprep.subr.mxu0 %v892
    %900 = vmatpush1.msra.mxu0 %v891
    %901 = vmatprep.subr.mxu0 0.0
    %902 = vmatpush1.msra.mxu0 0.0
    %903 = vmatprep.subr.mxu0 0.0
    %904 = vmatpush1.msra.mxu0 0.0
    %905 = vmatprep.subr.mxu0 0.0
    %906 = vmatpush1.msra.mxu0 0.0
    %907 = vmatprep.subr.mxu0 0.0
    %908 = vmatpush1.msra.mxu0 0.0
    %909 = vmatprep.subr.mxu0 0.0
    %910 = vmatpush1.msra.mxu0 0.0
    %911 = vmatprep.subr.mxu0 0.0
    %912 = vmatpush1.msra.mxu0 0.0
    %913 = vmatprep.subr.mxu0 0.0
    %914 = vmatpush1.msra.mxu0 0.0
    %915 = vmatprep.subr.mxu0 0.0
    %916 = vmatpush1.msra.mxu0 0.0
    %917 = vmatprep.subr.mxu0 0.0
    %918 = vmatpush1.msra.mxu0 0.0
    %919 = vmatprep.subr.mxu0 0.0
    %920 = vmatpush1.msra.mxu0 0.0
    %921 = vmatprep.subr.mxu0 0.0
    %922 = vmatpush1.msra.mxu0 0.0
    %923 = vmatprep.subr.mxu0 0.0
    %924 = vmatpush1.msra.mxu0 0.0
    %925 = vmatprep.subr.mxu0 0.0
    %926 = vmatpush1.msra.mxu0 0.0
    %927 = vmatprep.subr.mxu0 0.0
    %928 = vmatpush1.msra.mxu0 0.0
    %929 = vmatprep.subr.mxu0 0.0
    %930 = vmatpush1.msra.mxu0 0.0
    %931 = vmatprep.subr.mxu0 0.0
    %932 = vmatpush1.msra.mxu0 0.0
    %933 = vmatprep.subr.mxu0 0.0
    %934 = vmatpush1.msra.mxu0 0.0
    %935 = vmatprep.subr.mxu0 0.0
    %936 = vmatpush1.msra.mxu0 0.0
    %937 = vmatprep.subr.mxu0 0.0
    %938 = vmatpush1.msra.mxu0 0.0
    %939 = vmatprep.subr.mxu0 0.0
    %940 = vmatpush1.msra.mxu0 0.0
    %941 = vmatprep.subr.mxu0 0.0
    %942 = vmatpush1.msra.mxu0 0.0
    %943 = vmatprep.subr.mxu0 0.0
    %944 = vmatpush1.msra.mxu0 0.0
    %945 = vmatprep.subr.mxu0 0.0
    %946 = vmatpush1.msra.mxu0 0.0
    %947 = vmatprep.subr.mxu0 0.0
    %948 = vmatpush1.msra.mxu0 0.0
    %949 = vmatprep.subr.mxu0 0.0
    %950 = vmatpush1.msra.mxu0 0.0
    %951 = vmatprep.subr.mxu0 0.0
    %952 = vmatpush1.msra.mxu0 0.0
    %953 = vmatprep.subr.mxu0 0.0
    %954 = vmatpush1.msra.mxu0 0.0
    %955 = vmatprep.subr.mxu0 0.0
    %956 = vmatpush1.msra.mxu0 0.0
    %957 = vmatprep.mubr.f32.mxu0 0.0
    %958 = vmatmul.mubr.f32.gmra.mrb[0].mxu0 %v191
    %v959 = vpop.f32.mrb[0].mxu0
    %v960 = vadd.f32 %v175, %v959
    %v961 = vpop.f32.mrb[0].mxu0
    %v962 = vadd.f32 %v175, %v961
    %963 = vmatprep.mubr.f32.mxu0 0.0
    %964 = vmatmul.mubr.f32.gmra.mrb[0].mxu0 %v194
    %v965 = vpop.f32.mrb[0].mxu0
    %v966 = vadd.f32 %v179, %v965
    %v967 = vpop.f32.mrb[0].mxu0
    %v968 = vadd.f32 %v179, %v967
    %969 = vmatprep.mubr.f32.mxu0 0.0
    %970 = vmatmul.mubr.f32.gmra.mrb[0].mxu0 %v197
    %v971 = vpop.f32.mrb[0].mxu0
    %v972 = vadd.f32 %v183, %v971
    %v973 = vpop.f32.mrb[0].mxu0
    %v974 = vadd.f32 %v183, %v973
    %975 = vmatprep.mubr.f32.mxu0 0.0
    %976 = vmatmul.mubr.f32.gmra.mrb[0].mxu0 %v200
    %v977 = vpop.f32.mrb[0].mxu0
    %v978 = vadd.f32 %v187, %v977
    %v979 = vpop.f32.mrb[0].mxu0
    %v980 = vadd.f32 %v187, %v979
    %981 = vdwg.mxu0
    %v982 = vtanh.pop %v960
    %v983 = vtanh.pop %v962
    %v984 = vtanh.pop %v966
    %v985 = vtanh.pop %v968
    %v986 = vtanh.pop %v972
    %v987 = vtanh.pop %v974
    %v988 = vtanh.pop %v978
    %v989 = vtanh.pop %v980
    %990 = vmatprep.subr.mxu0 %v983
    %991 = vmatpush1.msra.mxu0 %v982
    %992 = vmatprep.subr.mxu0 %v985
    %993 = vmatpush1.msra.mxu0 %v984
    %994 = vmatprep.subr.mxu0 %v987
    %995 = vmatpush1.msra.mxu0 %v986
    %996 = vmatprep.subr.mxu0 %v989
    %997 = vmatpush1.msra.mxu0 %v988
    %998 = vmatprep.subr.mxu0 0.0
    %999 = vmatpush1.msra.mxu0 0.0
    %1000 = vmatprep.subr.mxu0 0.0
    %1001 = vmatpush1.msra.mxu0 0.0
    %1002 = vmatprep.subr.mxu0 0.0
    %1003 = vmatpush1.msra.mxu0 0.0
    %1004 = vmatprep.subr.mxu0 0.0
    %1005 = vmatpush1.msra.mxu0 0.0
    %1006 = vmatprep.subr.mxu0 0.0
    %1007 = vmatpush1.msra.mxu0 0.0
    %1008 = vmatprep.subr.mxu0 0.0
    %1009 = vmatpush1.msra.mxu0 0.0
    %1010 = vmatprep.subr.mxu0 0.0
    %1011 = vmatpush1.msra.mxu0 0.0
    %1012 = vmatprep.subr.mxu0 0.0
    %1013 = vmatpush1.msra.mxu0 0.0
    %1014 = vmatprep.subr.mxu0 0.0
    %1015 = vmatpush1.msra.mxu0 0.0
    %1016 = vmatprep.subr.mxu0 0.0
    %1017 = vmatpush1.msra.mxu0 0.0
    %1018 = vmatprep.subr.mxu0 0.0
    %1019 = vmatpush1.msra.mxu0 0.0
    %1020 = vmatprep.subr.mxu0 0.0
    %1021 = vmatpush1.msra.mxu0 0.0
    %1022 = vmatprep.subr.mxu0 0.0
    %1023 = vmatpush1.msra.mxu0 0.0
    %1024 = vmatprep.subr.mxu0 0.0
    %1025 = vmatpush1.msra.mxu0 0.0
    %1026 = vmatprep.subr.mxu0 0.0
    %1027 = vmatpush1.msra.mxu0 0.0
    %1028 = vmatprep.subr.mxu0 0.0
    %1029 = vmatpush1.msra.mxu0 0.0
    %1030 = vmatprep.subr.mxu0 0.0
    %1031 = vmatpush1.msra.mxu0 0.0
    %1032 = vmatprep.subr.mxu0 0.0
    %1033 = vmatpush1.msra.mxu0 0.0
    %1034 = vmatprep.subr.mxu0 0.0
    %1035 = vmatpush1.msra.mxu0 0.0
    %1036 = vmatprep.subr.mxu0 0.0
    %1037 = vmatpush1.msra.mxu0 0.0
    %1038 = vmatprep.subr.mxu0 0.0
    %1039 = vmatpush1.msra.mxu0 0.0
    %1040 = vmatprep.subr.mxu0 0.0
    %1041 = vmatpush1.msra.mxu0 0.0
    %1042 = vmatprep.subr.mxu0 0.0
    %1043 = vmatpush1.msra.mxu0 0.0
    %1044 = vmatprep.subr.mxu0 0.0
    %1045 = vmatpush1.msra.mxu0 0.0
    %1046 = vmatprep.subr.mxu0 0.0
    %1047 = vmatpush1.msra.mxu0 0.0
    %1048 = vmatprep.subr.mxu0 0.0
    %1049 = vmatpush1.msra.mxu0 0.0
    %1050 = vmatprep.subr.mxu0 0.0
    %1051 = vmatpush1.msra.mxu0 0.0
    %1052 = vmatprep.subr.mxu0 0.0
    %1053 = vmatpush1.msra.mxu0 0.0
    %1054 = vmatprep.mubr.f32.mxu0 0.0
    %1055 = vmatmul.mubr.f32.gmra.mrb[0].mxu0 %v316
    %v1056 = vpop.f32.mrb[0].mxu0
    %v1057 = vadd.f32 %v301, %v1056
    %v1058 = vpop.f32.mrb[0].mxu0
    %v1059 = vadd.f32 %v301, %v1058
    %1060 = vmatprep.mubr.f32.mxu0 0.0
    %1061 = vmatmul.mubr.f32.gmra.mrb[0].mxu0 %v319
    %v1062 = vpop.f32.mrb[0].mxu0
    %v1063 = vadd.f32 %v305, %v1062
    %v1064 = vpop.f32.mrb[0].mxu0
    %v1065 = vadd.f32 %v305, %v1064
    %1066 = vmatprep.mubr.f32.mxu0 0.0
    %1067 = vmatmul.mubr.f32.gmra.mrb[0].mxu0 %v322
    %v1068 = vpop.f32.mrb[0].mxu0
    %v1069 = vadd.f32 %v309, %v1068
    %v1070 = vpop.f32.mrb[0].mxu0
    %v1071 = vadd.f32 %v309, %v1070
    %1072 = vmatprep.mubr.f32.mxu0 0.0
    %1073 = vmatmul.mubr.f32.gmra.mrb[0].mxu0 %v325
    %v1074 = vpop.f32.mrb[0].mxu0
    %v1075 = vadd.f32 %v313, %v1074
    %v1076 = vpop.f32.mrb[0].mxu0
    %v1077 = vadd.f32 %v313, %v1076
    %1078 = vdwg.mxu0
    %v1079 = vtanh.pop %v1057
    %v1080 = vtanh.pop %v1059
    %v1081 = vtanh.pop %v1063
    %v1082 = vtanh.pop %v1065
    %v1083 = vtanh.pop %v1069
    %v1084 = vtanh.pop %v1071
    %v1085 = vtanh.pop %v1075
    %v1086 = vtanh.pop %v1077
    %v1087 = vmul.f32 %v1079, %v426
    %v1088 = vmul.f32 %v1080, %v426
    %v1089 = vmul.f32 %v1081, %v430
    %v1090 = vmul.f32 %v1082, %v430
    %v1091 = vmul.f32 %v1083, %v434
    %v1092 = vmul.f32 %v1084, %v434
    %v1093 = vmul.f32 %v1085, %v438
    %v1094 = vmul.f32 %v1086, %v438
    %v1095 = vadd.f32 %v1087, %v1089
    %v1096 = vadd.f32 %v1095, %v1091
    %v1097 = vadd.f32 %v1096, %v1093
    %v1098 = vrot.slane %v1097, 4
    %v1099 = vadd.f32 %v1097, %v1098
    %v1100 = vrot.slane %v1099, 2
    %v1101 = vadd.f32 %v1099, %v1100
    %v1102 = vrot.slane %v1101, 1
    %v1103 = vadd.f32 %v1101, %v1102
    %v1104 = vadd.f32 %v1088, %v1090
    %v1105 = vadd.f32 %v1104, %v1092
    %v1106 = vadd.f32 %v1105, %v1094
    %v1107 = vrot.slane %v1106, 4
    %v1108 = vadd.f32 %v1106, %v1107
    %v1109 = vrot.slane %v1108, 2
    %v1110 = vadd.f32 %v1108, %v1109
    %v1111 = vrot.slane %v1110, 1
    %v1112 = vadd.f32 %v1110, %v1111
    %v1113 = vadd.f32 %v1103, %v469
    %v1114 = vadd.f32 %v1112, %v469
    %v1117 = vcombine.low %v1113, %v1114
    %v1119 = vunpack.c.l.s4 1966171168
    %v1120 = vunpack.c.0.s8 %v1119
    %v1121 = vlaneseq
    %v1122 = vshrl.u32 %v1121, 7
    %v1123 = vsub.s32 %v1120, %v1122
    %v1124 = vrot.slane %v1117, %v1123
    %v1126 = vunpack.c.l.s4 1966171168
    %v1127 = vunpack.c.0.s8 %v1126
    %v1128 = vlaneseq
    %v1129 = vshrl.u32 %v1128, 7
    %v1130 = vsub.s32 %v1127, %v1129
    %v1131 = vrot.slane %v1124, %v1130
    %1133 = vst.msk [vmem:[#allocation5 + $0x4] sm:$0x3] %vm494, %v1131
    %v1134 = vld [vmem:[%s0 + $0xc] sm:$0xf]
    %v1136 = vlaneseq
    %v1137 = vshrl.u32 %v1136, 7
    %v1138 = vsub.s32 0, %v1137
    %v1139 = vrot.slane %v1134, %v1138
    %v1140 = vlaneseq
    %v1141 = vshrl.u32 %v1140, 7
    %v1142 = vsub.s32 2, %v1141
    %v1143 = vrot.slane %v1134, %v1142
    %v1146 = vlaneseq
    %v1147 = vshrl.u32 %v1146, 7
    %v1148 = vsub.s32 0, %v1147
    %v1149 = vrot.slane %v1139, %v1148
    %v1150 = vlaneseq
    %v1151 = vshrl.u32 %v1150, 7
    %v1152 = vsub.s32 0, %v1151
    %v1153 = vrot.slane %v1143, %v1152
    %v1154 = vmul.f32 %v47, %v1149
    %v1155 = vmul.f32 %v47, %v1153
    %v1156 = vmul.f32 %v52, %v1149
    %v1157 = vmul.f32 %v52, %v1153
    %v1158 = vmul.f32 %v57, %v1149
    %v1159 = vmul.f32 %v57, %v1153
    %v1160 = vmul.f32 %v62, %v1149
    %v1161 = vmul.f32 %v62, %v1153
    %v1162 = vadd.f32 %v93, %v1154
    %v1163 = vadd.f32 %v93, %v1155
    %v1164 = vadd.f32 %v97, %v1156
    %v1165 = vadd.f32 %v97, %v1157
    %v1166 = vadd.f32 %v101, %v1158
    %v1167 = vadd.f32 %v101, %v1159
    %v1168 = vadd.f32 %v105, %v1160
    %v1169 = vadd.f32 %v105, %v1161
    %v1170 = vlaneseq
    %v1171 = vshrl.u32 %v1170, 7
    %v1172 = vsub.s32 1, %v1171
    %v1173 = vrot.slane %v1134, %v1172
    %v1174 = vlaneseq
    %v1175 = vshrl.u32 %v1174, 7
    %v1176 = vsub.s32 3, %v1175
    %v1177 = vrot.slane %v1134, %v1176
    %v1180 = vlaneseq
    %v1181 = vshrl.u32 %v1180, 7
    %v1182 = vsub.s32 1, %v1181
    %v1183 = vrot.slane %v1173, %v1182
    %v1184 = vlaneseq
    %v1185 = vshrl.u32 %v1184, 7
    %v1186 = vsub.s32 1, %v1185
    %v1187 = vrot.slane %v1177, %v1186
    %v1188 = vmul.f32 %v117, %v1183
    %v1189 = vmul.f32 %v117, %v1187
    %v1190 = vmul.f32 %v121, %v1183
    %v1191 = vmul.f32 %v121, %v1187
    %v1192 = vmul.f32 %v125, %v1183
    %v1193 = vmul.f32 %v125, %v1187
    %v1194 = vmul.f32 %v129, %v1183
    %v1195 = vmul.f32 %v129, %v1187
    %v1196 = vadd.f32 %v1162, %v1188
    %v1197 = vadd.f32 %v1163, %v1189
    %v1198 = vadd.f32 %v1164, %v1190
    %v1199 = vadd.f32 %v1165, %v1191
    %v1200 = vadd.f32 %v1166, %v1192
    %v1201 = vadd.f32 %v1167, %v1193
    %v1202 = vadd.f32 %v1168, %v1194
    %v1203 = vadd.f32 %v1169, %v1195
    %v1204 = vtanh.pop %v1196
    %v1205 = vtanh.pop %v1197
    %v1206 = vtanh.pop %v1198
    %v1207 = vtanh.pop %v1199
    %v1208 = vtanh.pop %v1200
    %v1209 = vtanh.pop %v1201
    %v1210 = vtanh.pop %v1202
    %v1211 = vtanh.pop %v1203
    %1212 = vmatprep.subr.mxu0 %v1205
    %1213 = vmatpush1.msra.mxu0 %v1204
    %1214 = vmatprep.subr.mxu0 %v1207
    %1215 = vmatpush1.msra.mxu0 %v1206
    %1216 = vmatprep.subr.mxu0 %v1209
    %1217 = vmatpush1.msra.mxu0 %v1208
    %1218 = vmatprep.subr.mxu0 %v1211
    %1219 = vmatpush1.msra.mxu0 %v1210
    %1220 = vmatprep.subr.mxu0 0.0
    %1221 = vmatpush1.msra.mxu0 0.0
    %1222 = vmatprep.subr.mxu0 0.0
    %1223 = vmatpush1.msra.mxu0 0.0
    %1224 = vmatprep.subr.mxu0 0.0
    %1225 = vmatpush1.msra.mxu0 0.0
    %1226 = vmatprep.subr.mxu0 0.0
    %1227 = vmatpush1.msra.mxu0 0.0
    %1228 = vmatprep.subr.mxu0 0.0
    %1229 = vmatpush1.msra.mxu0 0.0
    %1230 = vmatprep.subr.mxu0 0.0
    %1231 = vmatpush1.msra.mxu0 0.0
    %1232 = vmatprep.subr.mxu0 0.0
    %1233 = vmatpush1.msra.mxu0 0.0
    %1234 = vmatprep.subr.mxu0 0.0
    %1235 = vmatpush1.msra.mxu0 0.0
    %1236 = vmatprep.subr.mxu0 0.0
    %1237 = vmatpush1.msra.mxu0 0.0
    %1238 = vmatprep.subr.mxu0 0.0
    %1239 = vmatpush1.msra.mxu0 0.0
    %1240 = vmatprep.subr.mxu0 0.0
    %1241 = vmatpush1.msra.mxu0 0.0
    %1242 = vmatprep.subr.mxu0 0.0
    %1243 = vmatpush1.msra.mxu0 0.0
    %1244 = vmatprep.subr.mxu0 0.0
    %1245 = vmatpush1.msra.mxu0 0.0
    %1246 = vmatprep.subr.mxu0 0.0
    %1247 = vmatpush1.msra.mxu0 0.0
    %1248 = vmatprep.subr.mxu0 0.0
    %1249 = vmatpush1.msra.mxu0 0.0
    %1250 = vmatprep.subr.mxu0 0.0
    %1251 = vmatpush1.msra.mxu0 0.0
    %1252 = vmatprep.subr.mxu0 0.0
    %1253 = vmatpush1.msra.mxu0 0.0
    %1254 = vmatprep.subr.mxu0 0.0
    %1255 = vmatpush1.msra.mxu0 0.0
    %1256 = vmatprep.subr.mxu0 0.0
    %1257 = vmatpush1.msra.mxu0 0.0
    %1258 = vmatprep.subr.mxu0 0.0
    %1259 = vmatpush1.msra.mxu0 0.0
    %1260 = vmatprep.subr.mxu0 0.0
    %1261 = vmatpush1.msra.mxu0 0.0
    %1262 = vmatprep.subr.mxu0 0.0
    %1263 = vmatpush1.msra.mxu0 0.0
    %1264 = vmatprep.subr.mxu0 0.0
    %1265 = vmatpush1.msra.mxu0 0.0
    %1266 = vmatprep.subr.mxu0 0.0
    %1267 = vmatpush1.msra.mxu0 0.0
    %1268 = vmatprep.subr.mxu0 0.0
    %1269 = vmatpush1.msra.mxu0 0.0
    %1270 = vmatprep.subr.mxu0 0.0
    %1271 = vmatpush1.msra.mxu0 0.0
    %1272 = vmatprep.subr.mxu0 0.0
    %1273 = vmatpush1.msra.mxu0 0.0
    %1274 = vmatprep.subr.mxu0 0.0
    %1275 = vmatpush1.msra.mxu0 0.0
    %1276 = vmatprep.mubr.f32.mxu0 0.0
    %1277 = vmatmul.mubr.f32.gmra.mrb[0].mxu0 %v191
    %v1278 = vpop.f32.mrb[0].mxu0
    %v1279 = vadd.f32 %v175, %v1278
    %v1280 = vpop.f32.mrb[0].mxu0
    %v1281 = vadd.f32 %v175, %v1280
    %1282 = vmatprep.mubr.f32.mxu0 0.0
    %1283 = vmatmul.mubr.f32.gmra.mrb[0].mxu0 %v194
    %v1284 = vpop.f32.mrb[0].mxu0
    %v1285 = vadd.f32 %v179, %v1284
    %v1286 = vpop.f32.mrb[0].mxu0
    %v1287 = vadd.f32 %v179, %v1286
    %1288 = vmatprep.mubr.f32.mxu0 0.0
    %1289 = vmatmul.mubr.f32.gmra.mrb[0].mxu0 %v197
    %v1290 = vpop.f32.mrb[0].mxu0
    %v1291 = vadd.f32 %v183, %v1290
    %v1292 = vpop.f32.mrb[0].mxu0
    %v1293 = vadd.f32 %v183, %v1292
    %1294 = vmatprep.mubr.f32.mxu0 0.0
    %1295 = vmatmul.mubr.f32.gmra.mrb[0].mxu0 %v200
    %v1296 = vpop.f32.mrb[0].mxu0
    %v1297 = vadd.f32 %v187, %v1296
    %v1298 = vpop.f32.mrb[0].mxu0
    %v1299 = vadd.f32 %v187, %v1298
    %1300 = vdwg.mxu0
    %v1301 = vtanh.pop %v1279
    %v1302 = vtanh.pop %v1281
    %v1303 = vtanh.pop %v1285
    %v1304 = vtanh.pop %v1287
    %v1305 = vtanh.pop %v1291
    %v1306 = vtanh.pop %v1293
    %v1307 = vtanh.pop %v1297
    %v1308 = vtanh.pop %v1299
    %1309 = vmatprep.subr.mxu0 %v1302
    %1310 = vmatpush1.msra.mxu0 %v1301
    %1311 = vmatprep.subr.mxu0 %v1304
    %1312 = vmatpush1.msra.mxu0 %v1303
    %1313 = vmatprep.subr.mxu0 %v1306
    %1314 = vmatpush1.msra.mxu0 %v1305
    %1315 = vmatprep.subr.mxu0 %v1308
    %1316 = vmatpush1.msra.mxu0 %v1307
    %1317 = vmatprep.subr.mxu0 0.0
    %1318 = vmatpush1.msra.mxu0 0.0
    %1319 = vmatprep.subr.mxu0 0.0
    %1320 = vmatpush1.msra.mxu0 0.0
    %1321 = vmatprep.subr.mxu0 0.0
    %1322 = vmatpush1.msra.mxu0 0.0
    %1323 = vmatprep.subr.mxu0 0.0
    %1324 = vmatpush1.msra.mxu0 0.0
    %1325 = vmatprep.subr.mxu0 0.0
    %1326 = vmatpush1.msra.mxu0 0.0
    %1327 = vmatprep.subr.mxu0 0.0
    %1328 = vmatpush1.msra.mxu0 0.0
    %1329 = vmatprep.subr.mxu0 0.0
    %1330 = vmatpush1.msra.mxu0 0.0
    %1331 = vmatprep.subr.mxu0 0.0
    %1332 = vmatpush1.msra.mxu0 0.0
    %1333 = vmatprep.subr.mxu0 0.0
    %1334 = vmatpush1.msra.mxu0 0.0
    %1335 = vmatprep.subr.mxu0 0.0
    %1336 = vmatpush1.msra.mxu0 0.0
    %1337 = vmatprep.subr.mxu0 0.0
    %1338 = vmatpush1.msra.mxu0 0.0
    %1339 = vmatprep.subr.mxu0 0.0
    %1340 = vmatpush1.msra.mxu0 0.0
    %1341 = vmatprep.subr.mxu0 0.0
    %1342 = vmatpush1.msra.mxu0 0.0
    %1343 = vmatprep.subr.mxu0 0.0
    %1344 = vmatpush1.msra.mxu0 0.0
    %1345 = vmatprep.subr.mxu0 0.0
    %1346 = vmatpush1.msra.mxu0 0.0
    %1347 = vmatprep.subr.mxu0 0.0
    %1348 = vmatpush1.msra.mxu0 0.0
    %1349 = vmatprep.subr.mxu0 0.0
    %1350 = vmatpush1.msra.mxu0 0.0
    %1351 = vmatprep.subr.mxu0 0.0
    %1352 = vmatpush1.msra.mxu0 0.0
    %1353 = vmatprep.subr.mxu0 0.0
    %1354 = vmatpush1.msra.mxu0 0.0
    %1355 = vmatprep.subr.mxu0 0.0
    %1356 = vmatpush1.msra.mxu0 0.0
    %1357 = vmatprep.subr.mxu0 0.0
    %1358 = vmatpush1.msra.mxu0 0.0
    %1359 = vmatprep.subr.mxu0 0.0
    %1360 = vmatpush1.msra.mxu0 0.0
    %1361 = vmatprep.subr.mxu0 0.0
    %1362 = vmatpush1.msra.mxu0 0.0
    %1363 = vmatprep.subr.mxu0 0.0
    %1364 = vmatpush1.msra.mxu0 0.0
    %1365 = vmatprep.subr.mxu0 0.0
    %1366 = vmatpush1.msra.mxu0 0.0
    %1367 = vmatprep.subr.mxu0 0.0
    %1368 = vmatpush1.msra.mxu0 0.0
    %1369 = vmatprep.subr.mxu0 0.0
    %1370 = vmatpush1.msra.mxu0 0.0
    %1371 = vmatprep.subr.mxu0 0.0
    %1372 = vmatpush1.msra.mxu0 0.0
    %1373 = vmatprep.mubr.f32.mxu0 0.0
    %1374 = vmatmul.mubr.f32.gmra.mrb[0].mxu0 %v316
    %v1375 = vpop.f32.mrb[0].mxu0
    %v1376 = vadd.f32 %v301, %v1375
    %v1377 = vpop.f32.mrb[0].mxu0
    %v1378 = vadd.f32 %v301, %v1377
    %1379 = vmatprep.mubr.f32.mxu0 0.0
    %1380 = vmatmul.mubr.f32.gmra.mrb[0].mxu0 %v319
    %v1381 = vpop.f32.mrb[0].mxu0
    %v1382 = vadd.f32 %v305, %v1381
    %v1383 = vpop.f32.mrb[0].mxu0
    %v1384 = vadd.f32 %v305, %v1383
    %1385 = vmatprep.mubr.f32.mxu0 0.0
    %1386 = vmatmul.mubr.f32.gmra.mrb[0].mxu0 %v322
    %v1387 = vpop.f32.mrb[0].mxu0
    %v1388 = vadd.f32 %v309, %v1387
    %v1389 = vpop.f32.mrb[0].mxu0
    %v1390 = vadd.f32 %v309, %v1389
    %1391 = vmatprep.mubr.f32.mxu0 0.0
    %1392 = vmatmul.mubr.f32.gmra.mrb[0].mxu0 %v325
    %v1393 = vpop.f32.mrb[0].mxu0
    %v1394 = vadd.f32 %v313, %v1393
    %v1395 = vpop.f32.mrb[0].mxu0
    %v1396 = vadd.f32 %v313, %v1395
    %1397 = vdwg.mxu0
    %v1398 = vtanh.pop %v1376
    %v1399 = vtanh.pop %v1378
    %v1400 = vtanh.pop %v1382
    %v1401 = vtanh.pop %v1384
    %v1402 = vtanh.pop %v1388
    %v1403 = vtanh.pop %v1390
    %v1404 = vtanh.pop %v1394
    %v1405 = vtanh.pop %v1396
    %v1406 = vmul.f32 %v1398, %v426
    %v1407 = vmul.f32 %v1399, %v426
    %v1408 = vmul.f32 %v1400, %v430
    %v1409 = vmul.f32 %v1401, %v430
    %v1410 = vmul.f32 %v1402, %v434
    %v1411 = vmul.f32 %v1403, %v434
    %v1412 = vmul.f32 %v1404, %v438
    %v1413 = vmul.f32 %v1405, %v438
    %v1414 = vadd.f32 %v1406, %v1408
    %v1415 = vadd.f32 %v1414, %v1410
    %v1416 = vadd.f32 %v1415, %v1412
    %v1417 = vrot.slane %v1416, 4
    %v1418 = vadd.f32 %v1416, %v1417
    %v1419 = vrot.slane %v1418, 2
    %v1420 = vadd.f32 %v1418, %v1419
    %v1421 = vrot.slane %v1420, 1
    %v1422 = vadd.f32 %v1420, %v1421
    %v1423 = vadd.f32 %v1407, %v1409
    %v1424 = vadd.f32 %v1423, %v1411
    %v1425 = vadd.f32 %v1424, %v1413
    %v1426 = vrot.slane %v1425, 4
    %v1427 = vadd.f32 %v1425, %v1426
    %v1428 = vrot.slane %v1427, 2
    %v1429 = vadd.f32 %v1427, %v1428
    %v1430 = vrot.slane %v1429, 1
    %v1431 = vadd.f32 %v1429, %v1430
    %v1432 = vadd.f32 %v1422, %v469
    %v1433 = vadd.f32 %v1431, %v469
    %v1436 = vcombine.low %v1432, %v1433
    %v1438 = vunpack.c.l.s4 1966171168
    %v1439 = vunpack.c.0.s8 %v1438
    %v1440 = vlaneseq
    %v1441 = vshrl.u32 %v1440, 7
    %v1442 = vsub.s32 %v1439, %v1441
    %v1443 = vrot.slane %v1436, %v1442
    %v1445 = vunpack.c.l.s4 1966171168
    %v1446 = vunpack.c.0.s8 %v1445
    %v1447 = vlaneseq
    %v1448 = vshrl.u32 %v1447, 7
    %v1449 = vsub.s32 %v1446, %v1448
    %v1450 = vrot.slane %v1443, %v1449
    %1452 = vst.msk [vmem:[#allocation5 + $0x6] sm:$0x3] %vm494, %v1450
    // Predicated region
    $region18: #{tpu_custom_call.1} parent=1 // pred_check
      _
    $region19: #{tpu_custom_call.1} parent=1 // pred_check_branch
      %1454 = sbr.rel (0) target = $region21
    $region20: #{tpu_custom_call.1} parent=1 // pred_region
      %s1456 = ssub.s32 128, 128
      %1457 = vsyncadd [#allocation4], %s1456
      %s1459 = sshll.u32 [#allocation5], 4
      %s1460 = int_to_ptr.vmem [resolvable:$true] %s1459
      %1462 = dma.vmem_to_hbm [thread:$0]  %s1460, 128, %s3, [#allocation4]
    $region21: #{tpu_custom_call.1} parent=1 // pred_fallthru
      _
    // Predicated region
    $region22: #{tpu_custom_call.1} parent=1 // pred_check
      _
    $region23: #{tpu_custom_call.1} parent=1 // pred_check_branch
      %1464 = sbr.rel (0) target = $region25
    $region24: #{tpu_custom_call.1} parent=1 // pred_region
      %1465 = dma.done [#allocation4], 128
    $region25: #{tpu_custom_call.1} parent=1 // pred_fallthru
      _
    %1466 = vsyncpa [#allocation3], 1
    %1467 = vsyncpa [#allocation4], 1

</llo_original>
